<compile_context>
chip_gen: v5e
topology: v5e:2x2
jax: 0.10.0
libtpu: 0.0.40
codegen_flags: <defaults>
</compile_context>

<pallas_src>
import jax
import jax.numpy as jnp
from jax import lax
from jax.experimental import pallas as pl
from jax.experimental.pallas import tpu as pltpu


def _round_up(x, m):
    return ((x + m - 1) // m) * m


def _gru_chunk_kernel(x_ref, h0_ref, w_ih_ref, b_i_ref, w_hh_ref, b_hn_ref,
                      w23_ref, b23_ref, logits_ref, hfinal_ref, h_scr):
    """One grid step = one chunk of TC timesteps.

    x_ref:   (TC, Bp, Ip)  time-major input chunk
    h0_ref:  (Bp, Hp)      initial hidden state
    w_ih:    (Ip, 3*Hp)    gate order [r, z, n], each gate lane-padded to Hp
    b_i:     (1, 3*Hp)     b_ih with b_hh[r], b_hh[z] folded in
    w_hh:    (Hp, 3*Hp)
    b_hn:    (1, Hp)       recurrent bias of the n gate only
    w23:     (Hp, Hp)      fused fc2@fc3 head,  b23: (1, Hp)
    h_scr:   (Bp, Hp)      persistent hidden-state scratch across grid steps
    """
    TC, Bp, Ip = x_ref.shape
    Hp = h0_ref.shape[1]
    c = pl.program_id(0)
    last = pl.num_programs(0) - 1

    @pl.when(c == 0)
    def _():
        h_scr[...] = h0_ref[...]

    # ---- Input projection for the whole chunk (hoisted out of the recurrence).
    # One (TC*Bp, Ip) x (Ip, 3Hp) matmul feeds the MXU with TC*Bp rows instead
    # of TC separate Bp-row pushes.  All non-r-gated biases are folded in here.
    x2 = x_ref[...].reshape(TC * Bp, Ip)
    gi = jnp.dot(x2, w_ih_ref[...], preferred_element_type=jnp.float32) \
        + b_i_ref[...]                                     # (TC*Bp, 3Hp)

    w_hh = w_hh_ref[...]
    # Hoist the n-gate recurrent-bias broadcast out of the time loop.
    b_hn = jnp.broadcast_to(b_hn_ref[...], (Bp, Hp))

    # ---- Serial recurrence over the chunk (statically unrolled).
    h = h_scr[...]
    for j in range(TC):
        gi_t = gi[j * Bp:(j + 1) * Bp, :]                  # (Bp, 3Hp), sublane-aligned
        gh = jnp.dot(h, w_hh, preferred_element_type=jnp.float32)
        r = jax.nn.sigmoid(gi_t[:, 0:Hp] + gh[:, 0:Hp])
        z = jax.nn.sigmoid(gi_t[:, Hp:2 * Hp] + gh[:, Hp:2 * Hp])
        n = jnp.tanh(gi_t[:, 2 * Hp:3 * Hp] + r * (gh[:, 2 * Hp:3 * Hp] + b_hn))
        h = n + z * (h - n)                                # == (1-z)*n + z*h
    h_scr[...] = h

    # ---- Final hidden state + fused fc2/fc3 head, only on the last chunk.
    @pl.when(c == last)
    def _():
        hfinal_ref[...] = h
        logits_ref[...] = jnp.dot(h, w23_ref[...],
                                  preferred_element_type=jnp.float32) + b23_ref[...]


def gru_bow_sa_net(inputs, hidden, params):
    """inputs: [B, T, I] (batch_first), hidden: [1, B, H].

    Returns (logits [B, H], hidden [1, B, H]) matching the torch module (eval mode).
    """
    B, T, I = inputs.shape
    H = hidden.shape[-1]
    f32 = jnp.float32

    Bp = _round_up(B, 8)        # sublane granule
    Ip = _round_up(I, 128)      # lane granule (matmul K)
    Hp = _round_up(H, 128)      # lane-dense hidden / gate width
    G = 3 * Hp

    # Time-chunk size: biggest of {32,16,8} that divides T, else whole T.
    TC = next((c for c in (32, 16, 8) if T % c == 0), T)
    grid = (T // TC,)

    # Time-major, padded copy of the input.  The transpose is fused by XLA into
    # the padding copy we need anyway -> single HBM materialization.
    x_tm = jnp.pad(jnp.transpose(inputs.astype(f32), (1, 0, 2)),
                   ((0, 0), (0, Bp - B), (0, Ip - I)))           # (T, Bp, Ip)
    h0 = jnp.pad(hidden[0].astype(f32), ((0, Bp - B), (0, Hp - H)))  # (Bp, Hp)

    def pad_gates(m, rows_to):
        # (rows, 3H) -> (rows_to, 3*Hp): each gate [r|z|n] gets its own
        # lane-aligned Hp-wide slab (zero-padded -> padded lanes stay inert).
        parts = jnp.split(m.astype(f32), 3, axis=1)
        parts = [jnp.pad(p, ((0, rows_to - p.shape[0]), (0, Hp - H))) for p in parts]
        return jnp.concatenate(parts, axis=1)

    w_ih = pad_gates(params["w_ih"], Ip)    # (Ip, 3Hp)
    w_hh = pad_gates(params["w_hh"], Hp)    # (Hp, 3Hp)
    b_ih = pad_gates(params["b_ih"], 1)     # (1, 3Hp)
    b_hh = pad_gates(params["b_hh"], 1)     # (1, 3Hp)

    # Fold the recurrent r/z biases into the chunk-level (input-side) bias; only
    # the n-gate recurrent bias must stay inside the r multiply.
    b_i = b_ih.at[:, :2 * Hp].add(b_hh[:, :2 * Hp])   # (1, 3Hp)
    b_hn = b_hh[:, 2 * Hp:3 * Hp]                     # (1, Hp)

    # Fuse fc2 -> dropout(eval: identity) -> fc3 into one affine head.
    # TODO(synk): training-mode dropout (p=0.5, 2x rescale) between fc2 and fc3
    # is not implemented; this fused head is valid only for eval/inference.
    w2 = jnp.pad(params["w2"].astype(f32), ((0, Hp - H), (0, Hp - H)))
    w3 = jnp.pad(params["w3"].astype(f32), ((0, Hp - H), (0, Hp - H)))
    b2 = jnp.pad(params["b2"].astype(f32), ((0, 0), (0, Hp - H)))
    b3 = jnp.pad(params["b3"].astype(f32), ((0, 0), (0, Hp - H)))
    w23 = w2 @ w3                            # (Hp, Hp)
    b23 = b2 @ w3 + b3                       # (1, Hp)

    def const_spec(shape):
        zeros = (0,) * len(shape)
        return pl.BlockSpec(shape, lambda c, _z=zeros: _z)

    logits_p, hfin_p = pl.pallas_call(
        _gru_chunk_kernel,
        out_shape=(jax.ShapeDtypeStruct((Bp, Hp), f32),
                   jax.ShapeDtypeStruct((Bp, Hp), f32)),
        grid=grid,
        in_specs=[
            pl.BlockSpec((TC, Bp, Ip), lambda c: (c, 0, 0)),  # streamed x chunk
            const_spec((Bp, Hp)),    # h0
            const_spec((Ip, G)),     # w_ih
            const_spec((1, G)),      # b_i  (b_ih + folded b_hh[r,z])
            const_spec((Hp, G)),     # w_hh
            const_spec((1, Hp)),     # b_hn (n-gate recurrent bias)
            const_spec((Hp, Hp)),    # fused head weight
            const_spec((1, Hp)),     # fused head bias
        ],
        out_specs=(const_spec((Bp, Hp)), const_spec((Bp, Hp))),
        scratch_shapes=[pltpu.VMEM((Bp, Hp), f32)],
        compiler_params=pltpu.CompilerParams(
            dimension_semantics=("arbitrary",)),   # recurrence is serial in time
    )(x_tm, h0, w_ih, b_i, w_hh, b_hn, w23, b23)

    logits = logits_p[:B, :H]
    h_final = hfin_p[:B, :H]
    return logits, h_final[None, :, :]


def init_params(key, input_size, hidden_size):
    """Deterministic init mirroring PyTorch shapes (weights stored pre-transposed for x @ W)."""
    H, I = hidden_size, input_size
    k = jax.random.split(key, 8)
    s = 1.0 / jnp.sqrt(jnp.float32(H))
    u = lambda kk, shp: jax.random.uniform(kk, shp, jnp.float32, -s, s)
    return {
        # GRU: torch weight_ih_l0 is (3H, I) -> stored as (I, 3H); gate order [r, z, n]
        "w_ih": u(k[0], (I, 3 * H)),
        "w_hh": u(k[1], (H, 3 * H)),
        "b_ih": u(k[2], (1, 3 * H)),
        "b_hh": u(k[3], (1, 3 * H)),
        # fc2: Linear(H, H)  (torch weight (H,H) -> stored transposed)
        "w2": u(k[4], (H, H)),
        "b2": u(k[5], (1, H)),
        # fc3: Linear(H, H)
        "w3": u(k[6], (H, H)),
        "b3": u(k[7], (1, H)),
    }


def _reference(inputs, hidden, params):
    """Pure-JAX eval-mode reference (unpadded), for a correctness cross-check."""
    B, T, I = inputs.shape
    H = hidden.shape[-1]
    hi = lax.Precision.HIGHEST
    h = hidden[0]
    for t in range(T):
        x_t = inputs[:, t, :]
        gi = jnp.dot(x_t, params["w_ih"], precision=hi) + params["b_ih"]
        gh = jnp.dot(h, params["w_hh"], precision=hi) + params["b_hh"]
        r = jax.nn.sigmoid(gi[:, :H] + gh[:, :H])
        z = jax.nn.sigmoid(gi[:, H:2 * H] + gh[:, H:2 * H])
        n = jnp.tanh(gi[:, 2 * H:] + r * gh[:, 2 * H:])
        h = (1.0 - z) * n + z * h
    y = jnp.dot(h, params["w2"], precision=hi) + params["b2"]
    logits = jnp.dot(y, params["w3"], precision=hi) + params["b3"]
    return logits, h[None]


if __name__ == "__main__":
    B, T, I, H = 2, 8, 16, 32

    key = jax.random.PRNGKey(0)
    k_in, k_p = jax.random.split(key)
    inputs = jax.random.normal(k_in, (B, T, I), jnp.float32)   # batch_first like PyTorch
    hidden = jnp.zeros((1, B, H), jnp.float32)                 # init_hidden(batch_size)
    params = init_params(k_p, I, H)

    logits, h_out = gru_bow_sa_net(inputs, hidden, params)
    jax.block_until_ready((logits, h_out))

    assert logits.shape == (B, H) and h_out.shape == (1, B, H)

    # Cross-check against a pure-JAX reference (eval semantics).
    ref_logits, ref_h = _reference(inputs, hidden, params)
    jax.block_until_ready((ref_logits, ref_h))
    assert jnp.allclose(logits, ref_logits, atol=5e-3, rtol=5e-3)
    assert jnp.allclose(h_out, ref_h, atol=5e-3, rtol=5e-3)

    print("KERNEL_OK")
</pallas_src>

<mosaic_0001>
module attributes {stable_mosaic.version = 11 : i64} {
  func.func @_gru_chunk_kernel(%arg0: i32, %arg1: memref<8x8x128xf32, #tpu.memory_space<vmem>>, %arg2: memref<8x128xf32, #tpu.memory_space<vmem>>, %arg3: memref<128x384xf32, #tpu.memory_space<vmem>>, %arg4: memref<1x384xf32, #tpu.memory_space<vmem>>, %arg5: memref<128x384xf32, #tpu.memory_space<vmem>>, %arg6: memref<1x128xf32, #tpu.memory_space<vmem>>, %arg7: memref<128x128xf32, #tpu.memory_space<vmem>>, %arg8: memref<1x128xf32, #tpu.memory_space<vmem>>, %arg9: memref<8x128xf32, #tpu.memory_space<vmem>>, %arg10: memref<8x128xf32, #tpu.memory_space<vmem>>, %arg11: memref<8x128xf32, #tpu.memory_space<vmem>>) attributes {dimension_semantics = [#tpu.dimension_semantics<arbitrary>], iteration_bounds = array<i64: 1>, scalar_prefetch = 0 : i64, scratch_operands = 1 : i64, tpu.core_type = #tpu.core_type<tc>, window_params = [{transform_indices = @transform_0, window_bounds = array<i64: 8, 8, 128>}, {pipeline_mode = #tpu.pipeline_mode<synchronous>, transform_indices = @transform_1, window_bounds = array<i64: 8, 128>}, {pipeline_mode = #tpu.pipeline_mode<synchronous>, transform_indices = @transform_2, window_bounds = array<i64: 128, 384>}, {pipeline_mode = #tpu.pipeline_mode<synchronous>, transform_indices = @transform_3, window_bounds = array<i64: 1, 384>}, {pipeline_mode = #tpu.pipeline_mode<synchronous>, transform_indices = @transform_4, window_bounds = array<i64: 128, 384>}, {pipeline_mode = #tpu.pipeline_mode<synchronous>, transform_indices = @transform_5, window_bounds = array<i64: 1, 128>}, {pipeline_mode = #tpu.pipeline_mode<synchronous>, transform_indices = @transform_6, window_bounds = array<i64: 128, 128>}, {pipeline_mode = #tpu.pipeline_mode<synchronous>, transform_indices = @transform_7, window_bounds = array<i64: 1, 128>}, {pipeline_mode = #tpu.pipeline_mode<synchronous>, transform_indices = @transform_8, window_bounds = array<i64: 8, 128>}, {pipeline_mode = #tpu.pipeline_mode<synchronous>, transform_indices = @transform_9, window_bounds = array<i64: 8, 128>}]} {
    %c0_i32 = arith.constant 0 : i32
    %0 = arith.cmpi eq, %arg0, %c0_i32 : i32
    %1 = arith.extui %0 : i1 to i32
    %c0_i32_0 = arith.constant 0 : i32
    %2 = arith.cmpi ne, %1, %c0_i32_0 : i32
    scf.if %2 {
      %c0_41 = arith.constant 0 : index
      %c0_42 = arith.constant 0 : index
      %235 = vector.load %arg2[%c0_41, %c0_42] : memref<8x128xf32, #tpu.memory_space<vmem>>, vector<8x128xf32>
      %c0_43 = arith.constant 0 : index
      %c0_44 = arith.constant 0 : index
      %236 = vector.load %arg11[%c0_43, %c0_44] : memref<8x128xf32, #tpu.memory_space<vmem>>, vector<8x128xf32>
      tpu.vector_store %arg11[%c0_43, %c0_44], %235 {strides = array<i32>} : memref<8x128xf32, #tpu.memory_space<vmem>>, vector<8x128xf32>,
    } else {
    }
    %c0 = arith.constant 0 : index
    %c0_1 = arith.constant 0 : index
    %c0_2 = arith.constant 0 : index
    %3 = vector.load %arg1[%c0, %c0_1, %c0_2] : memref<8x8x128xf32, #tpu.memory_space<vmem>>, vector<8x8x128xf32>
    %4 = vector.shape_cast %3 : vector<8x8x128xf32> to vector<64x128xf32>
    %c0_3 = arith.constant 0 : index
    %c0_4 = arith.constant 0 : index
    %5 = vector.load %arg3[%c0_3, %c0_4] : memref<128x384xf32, #tpu.memory_space<vmem>>, vector<128x384xf32>
    %cst = arith.constant dense<0.000000e+00> : vector<64x384xf32>
    %6 = tpu.matmul %4, %5, %cst {dimension_numbers = #tpu.dot_dimension_numbers<[1], [0], [0], [1], [0, 0, 1, 1], [], []>} : vector<64x128xf32>, vector<128x384xf32>, vector<64x384xf32> -> vector<64x384xf32>
    %c0_5 = arith.constant 0 : index
    %c0_6 = arith.constant 0 : index
    %7 = vector.load %arg4[%c0_5, %c0_6] : memref<1x384xf32, #tpu.memory_space<vmem>>, vector<1x384xf32>
    %8 = vector.broadcast %7 : vector<1x384xf32> to vector<64x384xf32>
    %9 = arith.addf %6, %8 : vector<64x384xf32>
    %c0_7 = arith.constant 0 : index
    %c0_8 = arith.constant 0 : index
    %10 = vector.load %arg5[%c0_7, %c0_8] : memref<128x384xf32, #tpu.memory_space<vmem>>, vector<128x384xf32>
    %c0_9 = arith.constant 0 : index
    %c0_10 = arith.constant 0 : index
    %11 = vector.load %arg6[%c0_9, %c0_10] : memref<1x128xf32, #tpu.memory_space<vmem>>, vector<1x128xf32>
    %12 = vector.shape_cast %11 : vector<1x128xf32> to vector<1x128xf32>
    %13 = vector.broadcast %12 : vector<1x128xf32> to vector<8x128xf32>
    %c0_11 = arith.constant 0 : index
    %c0_12 = arith.constant 0 : index
    %14 = vector.load %arg11[%c0_11, %c0_12] : memref<8x128xf32, #tpu.memory_space<vmem>>, vector<8x128xf32>
    %15 = vector.extract_strided_slice %9 {offsets = [0, 0], sizes = [8, 384], strides = [1, 1]} : vector<64x384xf32> to vector<8x384xf32>
    %cst_13 = arith.constant dense<0.000000e+00> : vector<8x384xf32>
    %16 = tpu.matmul %14, %10, %cst_13 {dimension_numbers = #tpu.dot_dimension_numbers<[1], [0], [0], [1], [0, 0, 1, 1], [], []>} : vector<8x128xf32>, vector<128x384xf32>, vector<8x384xf32> -> vector<8x384xf32>
    %17 = vector.extract_strided_slice %15 {offsets = [0, 0], sizes = [8, 128], strides = [1, 1]} : vector<8x384xf32> to vector<8x128xf32>
    %18 = vector.extract_strided_slice %16 {offsets = [0, 0], sizes = [8, 128], strides = [1, 1]} : vector<8x384xf32> to vector<8x128xf32>
    %19 = arith.addf %17, %18 : vector<8x128xf32>
    %20 = arith.negf %19 : vector<8x128xf32>
    %21 = math.exp %20 : vector<8x128xf32>
    %cst_14 = arith.constant 1.000000e+00 : f32
    %22 = vector.broadcast %cst_14 : f32 to vector<8x128xf32>
    %23 = arith.addf %22, %21 : vector<8x128xf32>
    %24 = arith.divf %22, %23 : vector<8x128xf32>
    %25 = vector.extract_strided_slice %15 {offsets = [0, 128], sizes = [8, 128], strides = [1, 1]} : vector<8x384xf32> to vector<8x128xf32>
    %26 = vector.extract_strided_slice %16 {offsets = [0, 128], sizes = [8, 128], strides = [1, 1]} : vector<8x384xf32> to vector<8x128xf32>
    %27 = arith.addf %25, %26 : vector<8x128xf32>
    %28 = arith.negf %27 : vector<8x128xf32>
    %29 = math.exp %28 : vector<8x128xf32>
    %cst_15 = arith.constant 1.000000e+00 : f32
    %30 = vector.broadcast %cst_15 : f32 to vector<8x128xf32>
    %31 = arith.addf %30, %29 : vector<8x128xf32>
    %32 = arith.divf %30, %31 : vector<8x128xf32>
    %33 = vector.extract_strided_slice %15 {offsets = [0, 256], sizes = [8, 128], strides = [1, 1]} : vector<8x384xf32> to vector<8x128xf32>
    %34 = vector.extract_strided_slice %16 {offsets = [0, 256], sizes = [8, 128], strides = [1, 1]} : vector<8x384xf32> to vector<8x128xf32>
    %35 = arith.addf %34, %13 : vector<8x128xf32>
    %36 = arith.mulf %24, %35 : vector<8x128xf32>
    %37 = arith.addf %33, %36 : vector<8x128xf32>
    %38 = math.tanh %37 : vector<8x128xf32>
    %39 = arith.subf %14, %38 : vector<8x128xf32>
    %40 = arith.mulf %32, %39 : vector<8x128xf32>
    %41 = arith.addf %38, %40 : vector<8x128xf32>
    %42 = vector.extract_strided_slice %9 {offsets = [8, 0], sizes = [8, 384], strides = [1, 1]} : vector<64x384xf32> to vector<8x384xf32>
    %cst_16 = arith.constant dense<0.000000e+00> : vector<8x384xf32>
    %43 = tpu.matmul %41, %10, %cst_16 {dimension_numbers = #tpu.dot_dimension_numbers<[1], [0], [0], [1], [0, 0, 1, 1], [], []>} : vector<8x128xf32>, vector<128x384xf32>, vector<8x384xf32> -> vector<8x384xf32>
    %44 = vector.extract_strided_slice %42 {offsets = [0, 0], sizes = [8, 128], strides = [1, 1]} : vector<8x384xf32> to vector<8x128xf32>
    %45 = vector.extract_strided_slice %43 {offsets = [0, 0], sizes = [8, 128], strides = [1, 1]} : vector<8x384xf32> to vector<8x128xf32>
    %46 = arith.addf %44, %45 : vector<8x128xf32>
    %47 = arith.negf %46 : vector<8x128xf32>
    %48 = math.exp %47 : vector<8x128xf32>
    %cst_17 = arith.constant 1.000000e+00 : f32
    %49 = vector.broadcast %cst_17 : f32 to vector<8x128xf32>
    %50 = arith.addf %49, %48 : vector<8x128xf32>
    %51 = arith.divf %49, %50 : vector<8x128xf32>
    %52 = vector.extract_strided_slice %42 {offsets = [0, 128], sizes = [8, 128], strides = [1, 1]} : vector<8x384xf32> to vector<8x128xf32>
    %53 = vector.extract_strided_slice %43 {offsets = [0, 128], sizes = [8, 128], strides = [1, 1]} : vector<8x384xf32> to vector<8x128xf32>
    %54 = arith.addf %52, %53 : vector<8x128xf32>
    %55 = arith.negf %54 : vector<8x128xf32>
    %56 = math.exp %55 : vector<8x128xf32>
    %cst_18 = arith.constant 1.000000e+00 : f32
    %57 = vector.broadcast %cst_18 : f32 to vector<8x128xf32>
    %58 = arith.addf %57, %56 : vector<8x128xf32>
    %59 = arith.divf %57, %58 : vector<8x128xf32>
    %60 = vector.extract_strided_slice %42 {offsets = [0, 256], sizes = [8, 128], strides = [1, 1]} : vector<8x384xf32> to vector<8x128xf32>
    %61 = vector.extract_strided_slice %43 {offsets = [0, 256], sizes = [8, 128], strides = [1, 1]} : vector<8x384xf32> to vector<8x128xf32>
    %62 = arith.addf %61, %13 : vector<8x128xf32>
    %63 = arith.mulf %51, %62 : vector<8x128xf32>
    %64 = arith.addf %60, %63 : vector<8x128xf32>
    %65 = math.tanh %64 : vector<8x128xf32>
    %66 = arith.subf %41, %65 : vector<8x128xf32>
    %67 = arith.mulf %59, %66 : vector<8x128xf32>
    %68 = arith.addf %65, %67 : vector<8x128xf32>
    %69 = vector.extract_strided_slice %9 {offsets = [16, 0], sizes = [8, 384], strides = [1, 1]} : vector<64x384xf32> to vector<8x384xf32>
    %cst_19 = arith.constant dense<0.000000e+00> : vector<8x384xf32>
    %70 = tpu.matmul %68, %10, %cst_19 {dimension_numbers = #tpu.dot_dimension_numbers<[1], [0], [0], [1], [0, 0, 1, 1], [], []>} : vector<8x128xf32>, vector<128x384xf32>, vector<8x384xf32> -> vector<8x384xf32>
    %71 = vector.extract_strided_slice %69 {offsets = [0, 0], sizes = [8, 128], strides = [1, 1]} : vector<8x384xf32> to vector<8x128xf32>
    %72 = vector.extract_strided_slice %70 {offsets = [0, 0], sizes = [8, 128], strides = [1, 1]} : vector<8x384xf32> to vector<8x128xf32>
    %73 = arith.addf %71, %72 : vector<8x128xf32>
    %74 = arith.negf %73 : vector<8x128xf32>
    %75 = math.exp %74 : vector<8x128xf32>
    %cst_20 = arith.constant 1.000000e+00 : f32
    %76 = vector.broadcast %cst_20 : f32 to vector<8x128xf32>
    %77 = arith.addf %76, %75 : vector<8x128xf32>
    %78 = arith.divf %76, %77 : vector<8x128xf32>
    %79 = vector.extract_strided_slice %69 {offsets = [0, 128], sizes = [8, 128], strides = [1, 1]} : vector<8x384xf32> to vector<8x128xf32>
    %80 = vector.extract_strided_slice %70 {offsets = [0, 128], sizes = [8, 128], strides = [1, 1]} : vector<8x384xf32> to vector<8x128xf32>
    %81 = arith.addf %79, %80 : vector<8x128xf32>
    %82 = arith.negf %81 : vector<8x128xf32>
    %83 = math.exp %82 : vector<8x128xf32>
    %cst_21 = arith.constant 1.000000e+00 : f32
    %84 = vector.broadcast %cst_21 : f32 to vector<8x128xf32>
    %85 = arith.addf %84, %83 : vector<8x128xf32>
    %86 = arith.divf %84, %85 : vector<8x128xf32>
    %87 = vector.extract_strided_slice %69 {offsets = [0, 256], sizes = [8, 128], strides = [1, 1]} : vector<8x384xf32> to vector<8x128xf32>
    %88 = vector.extract_strided_slice %70 {offsets = [0, 256], sizes = [8, 128], strides = [1, 1]} : vector<8x384xf32> to vector<8x128xf32>
    %89 = arith.addf %88, %13 : vector<8x128xf32>
    %90 = arith.mulf %78, %89 : vector<8x128xf32>
    %91 = arith.addf %87, %90 : vector<8x128xf32>
    %92 = math.tanh %91 : vector<8x128xf32>
    %93 = arith.subf %68, %92 : vector<8x128xf32>
    %94 = arith.mulf %86, %93 : vector<8x128xf32>
    %95 = arith.addf %92, %94 : vector<8x128xf32>
    %96 = vector.extract_strided_slice %9 {offsets = [24, 0], sizes = [8, 384], strides = [1, 1]} : vector<64x384xf32> to vector<8x384xf32>
    %cst_22 = arith.constant dense<0.000000e+00> : vector<8x384xf32>
    %97 = tpu.matmul %95, %10, %cst_22 {dimension_numbers = #tpu.dot_dimension_numbers<[1], [0], [0], [1], [0, 0, 1, 1], [], []>} : vector<8x128xf32>, vector<128x384xf32>, vector<8x384xf32> -> vector<8x384xf32>
    %98 = vector.extract_strided_slice %96 {offsets = [0, 0], sizes = [8, 128], strides = [1, 1]} : vector<8x384xf32> to vector<8x128xf32>
    %99 = vector.extract_strided_slice %97 {offsets = [0, 0], sizes = [8, 128], strides = [1, 1]} : vector<8x384xf32> to vector<8x128xf32>
    %100 = arith.addf %98, %99 : vector<8x128xf32>
    %101 = arith.negf %100 : vector<8x128xf32>
    %102 = math.exp %101 : vector<8x128xf32>
    %cst_23 = arith.constant 1.000000e+00 : f32
    %103 = vector.broadcast %cst_23 : f32 to vector<8x128xf32>
    %104 = arith.addf %103, %102 : vector<8x128xf32>
    %105 = arith.divf %103, %104 : vector<8x128xf32>
    %106 = vector.extract_strided_slice %96 {offsets = [0, 128], sizes = [8, 128], strides = [1, 1]} : vector<8x384xf32> to vector<8x128xf32>
    %107 = vector.extract_strided_slice %97 {offsets = [0, 128], sizes = [8, 128], strides = [1, 1]} : vector<8x384xf32> to vector<8x128xf32>
    %108 = arith.addf %106, %107 : vector<8x128xf32>
    %109 = arith.negf %108 : vector<8x128xf32>
    %110 = math.exp %109 : vector<8x128xf32>
    %cst_24 = arith.constant 1.000000e+00 : f32
    %111 = vector.broadcast %cst_24 : f32 to vector<8x128xf32>
    %112 = arith.addf %111, %110 : vector<8x128xf32>
    %113 = arith.divf %111, %112 : vector<8x128xf32>
    %114 = vector.extract_strided_slice %96 {offsets = [0, 256], sizes = [8, 128], strides = [1, 1]} : vector<8x384xf32> to vector<8x128xf32>
    %115 = vector.extract_strided_slice %97 {offsets = [0, 256], sizes = [8, 128], strides = [1, 1]} : vector<8x384xf32> to vector<8x128xf32>
    %116 = arith.addf %115, %13 : vector<8x128xf32>
    %117 = arith.mulf %105, %116 : vector<8x128xf32>
    %118 = arith.addf %114, %117 : vector<8x128xf32>
    %119 = math.tanh %118 : vector<8x128xf32>
    %120 = arith.subf %95, %119 : vector<8x128xf32>
    %121 = arith.mulf %113, %120 : vector<8x128xf32>
    %122 = arith.addf %119, %121 : vector<8x128xf32>
    %123 = vector.extract_strided_slice %9 {offsets = [32, 0], sizes = [8, 384], strides = [1, 1]} : vector<64x384xf32> to vector<8x384xf32>
    %cst_25 = arith.constant dense<0.000000e+00> : vector<8x384xf32>
    %124 = tpu.matmul %122, %10, %cst_25 {dimension_numbers = #tpu.dot_dimension_numbers<[1], [0], [0], [1], [0, 0, 1, 1], [], []>} : vector<8x128xf32>, vector<128x384xf32>, vector<8x384xf32> -> vector<8x384xf32>
    %125 = vector.extract_strided_slice %123 {offsets = [0, 0], sizes = [8, 128], strides = [1, 1]} : vector<8x384xf32> to vector<8x128xf32>
    %126 = vector.extract_strided_slice %124 {offsets = [0, 0], sizes = [8, 128], strides = [1, 1]} : vector<8x384xf32> to vector<8x128xf32>
    %127 = arith.addf %125, %126 : vector<8x128xf32>
    %128 = arith.negf %127 : vector<8x128xf32>
    %129 = math.exp %128 : vector<8x128xf32>
    %cst_26 = arith.constant 1.000000e+00 : f32
    %130 = vector.broadcast %cst_26 : f32 to vector<8x128xf32>
    %131 = arith.addf %130, %129 : vector<8x128xf32>
    %132 = arith.divf %130, %131 : vector<8x128xf32>
    %133 = vector.extract_strided_slice %123 {offsets = [0, 128], sizes = [8, 128], strides = [1, 1]} : vector<8x384xf32> to vector<8x128xf32>
    %134 = vector.extract_strided_slice %124 {offsets = [0, 128], sizes = [8, 128], strides = [1, 1]} : vector<8x384xf32> to vector<8x128xf32>
    %135 = arith.addf %133, %134 : vector<8x128xf32>
    %136 = arith.negf %135 : vector<8x128xf32>
    %137 = math.exp %136 : vector<8x128xf32>
    %cst_27 = arith.constant 1.000000e+00 : f32
    %138 = vector.broadcast %cst_27 : f32 to vector<8x128xf32>
    %139 = arith.addf %138, %137 : vector<8x128xf32>
    %140 = arith.divf %138, %139 : vector<8x128xf32>
    %141 = vector.extract_strided_slice %123 {offsets = [0, 256], sizes = [8, 128], strides = [1, 1]} : vector<8x384xf32> to vector<8x128xf32>
    %142 = vector.extract_strided_slice %124 {offsets = [0, 256], sizes = [8, 128], strides = [1, 1]} : vector<8x384xf32> to vector<8x128xf32>
    %143 = arith.addf %142, %13 : vector<8x128xf32>
    %144 = arith.mulf %132, %143 : vector<8x128xf32>
    %145 = arith.addf %141, %144 : vector<8x128xf32>
    %146 = math.tanh %145 : vector<8x128xf32>
    %147 = arith.subf %122, %146 : vector<8x128xf32>
    %148 = arith.mulf %140, %147 : vector<8x128xf32>
    %149 = arith.addf %146, %148 : vector<8x128xf32>
    %150 = vector.extract_strided_slice %9 {offsets = [40, 0], sizes = [8, 384], strides = [1, 1]} : vector<64x384xf32> to vector<8x384xf32>
    %cst_28 = arith.constant dense<0.000000e+00> : vector<8x384xf32>
    %151 = tpu.matmul %149, %10, %cst_28 {dimension_numbers = #tpu.dot_dimension_numbers<[1], [0], [0], [1], [0, 0, 1, 1], [], []>} : vector<8x128xf32>, vector<128x384xf32>, vector<8x384xf32> -> vector<8x384xf32>
    %152 = vector.extract_strided_slice %150 {offsets = [0, 0], sizes = [8, 128], strides = [1, 1]} : vector<8x384xf32> to vector<8x128xf32>
    %153 = vector.extract_strided_slice %151 {offsets = [0, 0], sizes = [8, 128], strides = [1, 1]} : vector<8x384xf32> to vector<8x128xf32>
    %154 = arith.addf %152, %153 : vector<8x128xf32>
    %155 = arith.negf %154 : vector<8x128xf32>
    %156 = math.exp %155 : vector<8x128xf32>
    %cst_29 = arith.constant 1.000000e+00 : f32
    %157 = vector.broadcast %cst_29 : f32 to vector<8x128xf32>
    %158 = arith.addf %157, %156 : vector<8x128xf32>
    %159 = arith.divf %157, %158 : vector<8x128xf32>
    %160 = vector.extract_strided_slice %150 {offsets = [0, 128], sizes = [8, 128], strides = [1, 1]} : vector<8x384xf32> to vector<8x128xf32>
    %161 = vector.extract_strided_slice %151 {offsets = [0, 128], sizes = [8, 128], strides = [1, 1]} : vector<8x384xf32> to vector<8x128xf32>
    %162 = arith.addf %160, %161 : vector<8x128xf32>
    %163 = arith.negf %162 : vector<8x128xf32>
    %164 = math.exp %163 : vector<8x128xf32>
    %cst_30 = arith.constant 1.000000e+00 : f32
    %165 = vector.broadcast %cst_30 : f32 to vector<8x128xf32>
    %166 = arith.addf %165, %164 : vector<8x128xf32>
    %167 = arith.divf %165, %166 : vector<8x128xf32>
    %168 = vector.extract_strided_slice %150 {offsets = [0, 256], sizes = [8, 128], strides = [1, 1]} : vector<8x384xf32> to vector<8x128xf32>
    %169 = vector.extract_strided_slice %151 {offsets = [0, 256], sizes = [8, 128], strides = [1, 1]} : vector<8x384xf32> to vector<8x128xf32>
    %170 = arith.addf %169, %13 : vector<8x128xf32>
    %171 = arith.mulf %159, %170 : vector<8x128xf32>
    %172 = arith.addf %168, %171 : vector<8x128xf32>
    %173 = math.tanh %172 : vector<8x128xf32>
    %174 = arith.subf %149, %173 : vector<8x128xf32>
    %175 = arith.mulf %167, %174 : vector<8x128xf32>
    %176 = arith.addf %173, %175 : vector<8x128xf32>
    %177 = vector.extract_strided_slice %9 {offsets = [48, 0], sizes = [8, 384], strides = [1, 1]} : vector<64x384xf32> to vector<8x384xf32>
    %cst_31 = arith.constant dense<0.000000e+00> : vector<8x384xf32>
    %178 = tpu.matmul %176, %10, %cst_31 {dimension_numbers = #tpu.dot_dimension_numbers<[1], [0], [0], [1], [0, 0, 1, 1], [], []>} : vector<8x128xf32>, vector<128x384xf32>, vector<8x384xf32> -> vector<8x384xf32>
    %179 = vector.extract_strided_slice %177 {offsets = [0, 0], sizes = [8, 128], strides = [1, 1]} : vector<8x384xf32> to vector<8x128xf32>
    %180 = vector.extract_strided_slice %178 {offsets = [0, 0], sizes = [8, 128], strides = [1, 1]} : vector<8x384xf32> to vector<8x128xf32>
    %181 = arith.addf %179, %180 : vector<8x128xf32>
    %182 = arith.negf %181 : vector<8x128xf32>
    %183 = math.exp %182 : vector<8x128xf32>
    %cst_32 = arith.constant 1.000000e+00 : f32
    %184 = vector.broadcast %cst_32 : f32 to vector<8x128xf32>
    %185 = arith.addf %184, %183 : vector<8x128xf32>
    %186 = arith.divf %184, %185 : vector<8x128xf32>
    %187 = vector.extract_strided_slice %177 {offsets = [0, 128], sizes = [8, 128], strides = [1, 1]} : vector<8x384xf32> to vector<8x128xf32>
    %188 = vector.extract_strided_slice %178 {offsets = [0, 128], sizes = [8, 128], strides = [1, 1]} : vector<8x384xf32> to vector<8x128xf32>
    %189 = arith.addf %187, %188 : vector<8x128xf32>
    %190 = arith.negf %189 : vector<8x128xf32>
    %191 = math.exp %190 : vector<8x128xf32>
    %cst_33 = arith.constant 1.000000e+00 : f32
    %192 = vector.broadcast %cst_33 : f32 to vector<8x128xf32>
    %193 = arith.addf %192, %191 : vector<8x128xf32>
    %194 = arith.divf %192, %193 : vector<8x128xf32>
    %195 = vector.extract_strided_slice %177 {offsets = [0, 256], sizes = [8, 128], strides = [1, 1]} : vector<8x384xf32> to vector<8x128xf32>
    %196 = vector.extract_strided_slice %178 {offsets = [0, 256], sizes = [8, 128], strides = [1, 1]} : vector<8x384xf32> to vector<8x128xf32>
    %197 = arith.addf %196, %13 : vector<8x128xf32>
    %198 = arith.mulf %186, %197 : vector<8x128xf32>
    %199 = arith.addf %195, %198 : vector<8x128xf32>
    %200 = math.tanh %199 : vector<8x128xf32>
    %201 = arith.subf %176, %200 : vector<8x128xf32>
    %202 = arith.mulf %194, %201 : vector<8x128xf32>
    %203 = arith.addf %200, %202 : vector<8x128xf32>
    %204 = vector.extract_strided_slice %9 {offsets = [56, 0], sizes = [8, 384], strides = [1, 1]} : vector<64x384xf32> to vector<8x384xf32>
    %cst_34 = arith.constant dense<0.000000e+00> : vector<8x384xf32>
    %205 = tpu.matmul %203, %10, %cst_34 {dimension_numbers = #tpu.dot_dimension_numbers<[1], [0], [0], [1], [0, 0, 1, 1], [], []>} : vector<8x128xf32>, vector<128x384xf32>, vector<8x384xf32> -> vector<8x384xf32>
    %206 = vector.extract_strided_slice %204 {offsets = [0, 0], sizes = [8, 128], strides = [1, 1]} : vector<8x384xf32> to vector<8x128xf32>
    %207 = vector.extract_strided_slice %205 {offsets = [0, 0], sizes = [8, 128], strides = [1, 1]} : vector<8x384xf32> to vector<8x128xf32>
    %208 = arith.addf %206, %207 : vector<8x128xf32>
    %209 = arith.negf %208 : vector<8x128xf32>
    %210 = math.exp %209 : vector<8x128xf32>
    %cst_35 = arith.constant 1.000000e+00 : f32
    %211 = vector.broadcast %cst_35 : f32 to vector<8x128xf32>
    %212 = arith.addf %211, %210 : vector<8x128xf32>
    %213 = arith.divf %211, %212 : vector<8x128xf32>
    %214 = vector.extract_strided_slice %204 {offsets = [0, 128], sizes = [8, 128], strides = [1, 1]} : vector<8x384xf32> to vector<8x128xf32>
    %215 = vector.extract_strided_slice %205 {offsets = [0, 128], sizes = [8, 128], strides = [1, 1]} : vector<8x384xf32> to vector<8x128xf32>
    %216 = arith.addf %214, %215 : vector<8x128xf32>
    %217 = arith.negf %216 : vector<8x128xf32>
    %218 = math.exp %217 : vector<8x128xf32>
    %cst_36 = arith.constant 1.000000e+00 : f32
    %219 = vector.broadcast %cst_36 : f32 to vector<8x128xf32>
    %220 = arith.addf %219, %218 : vector<8x128xf32>
    %221 = arith.divf %219, %220 : vector<8x128xf32>
    %222 = vector.extract_strided_slice %204 {offsets = [0, 256], sizes = [8, 128], strides = [1, 1]} : vector<8x384xf32> to vector<8x128xf32>
    %223 = vector.extract_strided_slice %205 {offsets = [0, 256], sizes = [8, 128], strides = [1, 1]} : vector<8x384xf32> to vector<8x128xf32>
    %224 = arith.addf %223, %13 : vector<8x128xf32>
    %225 = arith.mulf %213, %224 : vector<8x128xf32>
    %226 = arith.addf %222, %225 : vector<8x128xf32>
    %227 = math.tanh %226 : vector<8x128xf32>
    %228 = arith.subf %203, %227 : vector<8x128xf32>
    %229 = arith.mulf %221, %228 : vector<8x128xf32>
    %230 = arith.addf %227, %229 : vector<8x128xf32>
    %c0_37 = arith.constant 0 : index
    %c0_38 = arith.constant 0 : index
    %231 = vector.load %arg11[%c0_37, %c0_38] : memref<8x128xf32, #tpu.memory_space<vmem>>, vector<8x128xf32>
    tpu.vector_store %arg11[%c0_37, %c0_38], %230 {strides = array<i32>} : memref<8x128xf32, #tpu.memory_space<vmem>>, vector<8x128xf32>,
    %c0_i32_39 = arith.constant 0 : i32
    %232 = arith.cmpi eq, %arg0, %c0_i32_39 : i32
    %233 = arith.extui %232 : i1 to i32
    %c0_i32_40 = arith.constant 0 : i32
    %234 = arith.cmpi ne, %233, %c0_i32_40 : i32
    scf.if %234 {
      %c0_41 = arith.constant 0 : index
      %c0_42 = arith.constant 0 : index
      %235 = vector.load %arg10[%c0_41, %c0_42] : memref<8x128xf32, #tpu.memory_space<vmem>>, vector<8x128xf32>
      tpu.vector_store %arg10[%c0_41, %c0_42], %230 {strides = array<i32>} : memref<8x128xf32, #tpu.memory_space<vmem>>, vector<8x128xf32>,
      %c0_43 = arith.constant 0 : index
      %c0_44 = arith.constant 0 : index
      %236 = vector.load %arg7[%c0_43, %c0_44] : memref<128x128xf32, #tpu.memory_space<vmem>>, vector<128x128xf32>
      %cst_45 = arith.constant dense<0.000000e+00> : vector<8x128xf32>
      %237 = tpu.matmul %230, %236, %cst_45 {dimension_numbers = #tpu.dot_dimension_numbers<[1], [0], [0], [1], [0, 0, 1, 1], [], []>} : vector<8x128xf32>, vector<128x128xf32>, vector<8x128xf32> -> vector<8x128xf32>
      %c0_46 = arith.constant 0 : index
      %c0_47 = arith.constant 0 : index
      %238 = vector.load %arg8[%c0_46, %c0_47] : memref<1x128xf32, #tpu.memory_space<vmem>>, vector<1x128xf32>
      %239 = vector.broadcast %238 : vector<1x128xf32> to vector<8x128xf32>
      %240 = arith.addf %237, %239 : vector<8x128xf32>
      %c0_48 = arith.constant 0 : index
      %c0_49 = arith.constant 0 : index
      %241 = vector.load %arg9[%c0_48, %c0_49] : memref<8x128xf32, #tpu.memory_space<vmem>>, vector<8x128xf32>
      tpu.vector_store %arg9[%c0_48, %c0_49], %240 {strides = array<i32>} : memref<8x128xf32, #tpu.memory_space<vmem>>, vector<8x128xf32>,
    } else {
    }
    return
  }
  func.func @transform_0(%arg0: i32) -> (i32, i32, i32) {
    %c0_i32 = arith.constant 0 : i32
    %c0_i32_0 = arith.constant 0 : i32
    %c0_i32_1 = arith.constant 0 : i32
    return %arg0, %c0_i32, %c0_i32_0 : i32, i32, i32
  }
  func.func @transform_1(%arg0: i32) -> (i32, i32) {
    %c0_i32 = arith.constant 0 : i32
    %c0_i32_0 = arith.constant 0 : i32
    %c0_i32_1 = arith.constant 0 : i32
    return %c0_i32, %c0_i32_0 : i32, i32
  }
  func.func @transform_2(%arg0: i32) -> (i32, i32) {
    %c0_i32 = arith.constant 0 : i32
    %c0_i32_0 = arith.constant 0 : i32
    %c0_i32_1 = arith.constant 0 : i32
    return %c0_i32, %c0_i32_0 : i32, i32
  }
  func.func @transform_3(%arg0: i32) -> (i32, i32) {
    %c0_i32 = arith.constant 0 : i32
    %c0_i32_0 = arith.constant 0 : i32
    %c0_i32_1 = arith.constant 0 : i32
    return %c0_i32, %c0_i32_0 : i32, i32
  }
  func.func @transform_4(%arg0: i32) -> (i32, i32) {
    %c0_i32 = arith.constant 0 : i32
    %c0_i32_0 = arith.constant 0 : i32
    %c0_i32_1 = arith.constant 0 : i32
    return %c0_i32, %c0_i32_0 : i32, i32
  }
  func.func @transform_5(%arg0: i32) -> (i32, i32) {
    %c0_i32 = arith.constant 0 : i32
    %c0_i32_0 = arith.constant 0 : i32
    %c0_i32_1 = arith.constant 0 : i32
    return %c0_i32, %c0_i32_0 : i32, i32
  }
  func.func @transform_6(%arg0: i32) -> (i32, i32) {
    %c0_i32 = arith.constant 0 : i32
    %c0_i32_0 = arith.constant 0 : i32
    %c0_i32_1 = arith.constant 0 : i32
    return %c0_i32, %c0_i32_0 : i32, i32
  }
  func.func @transform_7(%arg0: i32) -> (i32, i32) {
    %c0_i32 = arith.constant 0 : i32
    %c0_i32_0 = arith.constant 0 : i32
    %c0_i32_1 = arith.constant 0 : i32
    return %c0_i32, %c0_i32_0 : i32, i32
  }
  func.func @transform_8(%arg0: i32) -> (i32, i32) {
    %c0_i32 = arith.constant 0 : i32
    %c0_i32_0 = arith.constant 0 : i32
    %c0_i32_1 = arith.constant 0 : i32
    return %c0_i32, %c0_i32_0 : i32, i32
  }
  func.func @transform_9(%arg0: i32) -> (i32, i32) {
    %c0_i32 = arith.constant 0 : i32
    %c0_i32_0 = arith.constant 0 : i32
    %c0_i32_1 = arith.constant 0 : i32
    return %c0_i32, %c0_i32_0 : i32, i32
  }
}

</mosaic_0001>

<llo_original>
// kernel: tpu_custom_call.1
$region0: #{tpu_custom_call.1}
  #allocation0 [shape = 'u32[]', space=smem, size = 0x4, offset = 0x4, fixed_abs, tag = 'smem constant byte address 0x4 - core index']
  #allocation1 [shape = 'u32[72,128]{1,0:T(1,128)}', space=vmem, size = 0x9000, scoped, tag = 'internal scratch']
  #allocation2 [shape = 'f32[8,128]{1,0:T(8,128)}', space=vmem, size = 0x1000, scoped, tag = 'scratch operand']
  %s0 = inlined_call_operand.hbm [shape: f32[8,8,128], index: 0, kind: input, shape index: {}]
  %s1 = inlined_call_operand.hbm [shape: f32[8,128], index: 1, kind: input, shape index: {}]
  %s2 = inlined_call_operand.hbm [shape: f32[128,384], index: 2, kind: input, shape index: {}]
  %s3 = inlined_call_operand.hbm [shape: f32[1,384], index: 3, kind: input, shape index: {}]
  %s4 = inlined_call_operand.hbm [shape: f32[128,384], index: 4, kind: input, shape index: {}]
  %s5 = inlined_call_operand.vmem [shape: f32[1,128], index: 5, kind: input, shape index: {}]
  %s6 = inlined_call_operand.hbm [shape: f32[128,128], index: 6, kind: input, shape index: {}]
  %s7 = inlined_call_operand.vmem [shape: f32[1,128], index: 7, kind: input, shape index: {}]
  %s8 = inlined_call_operand.hbm [shape: f32[8,128], index: 8, kind: output, shape index: {0}]
  %s9 = inlined_call_operand.hbm [shape: f32[8,128], index: 9, kind: output, shape index: {1}]
  %10 = xla_tuple %s8, %s9
  %s11 = sld [smem:[#allocation0]]
  $region82: #{tpu_custom_call.1} parent=0
    _
  %s13 = ssub.s32 1, %s11
  %s14 = scalar_select 0, %s13, %s11
  $region1: #{tpu_custom_call.1} parent=0
    #allocation3 [shape = 'u8[32768]{0}', space=vmem, size = 0x8000, scoped, tag = 'input window, operand 0, single buffered']
    #allocation4 [shape = 's32[1]{0}', space=sflag, size = 0x4, scoped, tag = 'scoped memory for tpu_custom_call.1']
    #allocation5 [shape = 's32[1]{0}', space=sflag, size = 0x4, scoped, tag = 'scoped memory for tpu_custom_call.1']
    #allocation6 [shape = 'u8[4096]{0}', space=vmem, size = 0x1000, scoped, tag = 'input window, operand 1, single buffered']
    #allocation7 [shape = 's32[1]{0}', space=sflag, size = 0x4, scoped, tag = 'scoped memory for tpu_custom_call.1']
    #allocation8 [shape = 'u8[196608]{0}', space=vmem, size = 0x30000, scoped, tag = 'input window, operand 2, single buffered']
    #allocation9 [shape = 'u8[1536]{0}', space=vmem, size = 0x800, scoped, tag = 'input window, operand 3, single buffered']
    #allocation10 [shape = 's32[1]{0}', space=sflag, size = 0x4, scoped, tag = 'scoped memory for tpu_custom_call.1']
    #allocation11 [shape = 'u8[196608]{0}', space=vmem, size = 0x30000, scoped, tag = 'input window, operand 4, single buffered']
    #allocation12 [shape = 'u8[65536]{0}', space=vmem, size = 0x10000, scoped, tag = 'input window, operand 6, single buffered']
    #allocation13 [shape = 's32[1]{0}', space=sflag, size = 0x4, scoped, tag = 'scoped memory for tpu_custom_call.1']
    #allocation14 [shape = 'u8[4096]{0}', space=vmem, size = 0x1000, scoped, tag = 'output window, operand 0, single buffered']
    #allocation15 [shape = 'u8[4096]{0}', space=vmem, size = 0x1000, scoped, tag = 'output window, operand 1, single buffered']
    #allocation16 [shape = 's32[1]{0}', space=sflag, size = 0x4, scoped, tag = 'scoped memory for tpu_custom_call.1']
    %15 = vsyncpa [#allocation4], 0
    %16 = vsyncpa [#allocation7], 0
    %17 = vsyncpa [#allocation10], 0
    %18 = vsyncpa [#allocation13], 0
    %19 = vsyncpa [#allocation5], 0
    %20 = vsyncpa [#allocation16], 0
    // Predicated region
    $region2: #{tpu_custom_call.1} parent=1 // pred_check
      _
    $region3: #{tpu_custom_call.1} parent=1 // pred_check_branch
      %22 = sbr.rel (0) target = $region5
    $region4: #{tpu_custom_call.1} parent=1 // pred_region
      %24 = vsyncadd [#allocation4], 0
      %s25 = sshll.u32 %s0, 4
      %s26 = int_to_ptr.hbm [resolvable:$true] %s25
      %s27 = sshll.u32 [#allocation3], 4
      %s28 = int_to_ptr.vmem [resolvable:$true] %s27
      %33 = dma.hbm_to_vmem [thread:$0]  %s26, 1024, %s28, [#allocation4], 128, 128, 8
    $region5: #{tpu_custom_call.1} parent=1 // pred_fallthru
      _
    // Predicated region
    $region6: #{tpu_custom_call.1} parent=1 // pred_check
      _
    $region7: #{tpu_custom_call.1} parent=1 // pred_check_branch
      %35 = sbr.rel (0) target = $region9
    $region8: #{tpu_custom_call.1} parent=1 // pred_region
      %37 = vsyncadd [#allocation7], 0
      %s39 = sshll.u32 %s1, 4
      %s40 = int_to_ptr.hbm [resolvable:$true] %s39
      %s41 = sshll.u32 [#allocation6], 4
      %s42 = int_to_ptr.vmem [resolvable:$true] %s41
      %44 = dma.hbm_to_vmem [thread:$0]  %s40, 128, %s42, [#allocation7]
    $region9: #{tpu_custom_call.1} parent=1 // pred_fallthru
      _
    // Predicated region
    $region10: #{tpu_custom_call.1} parent=1 // pred_check
      _
    $region11: #{tpu_custom_call.1} parent=1 // pred_check_branch
      %46 = sbr.rel (0) target = $region13
    $region12: #{tpu_custom_call.1} parent=1 // pred_region
      %48 = vsyncadd [#allocation7], 0
      %s49 = sshll.u32 %s2, 4
      %s50 = int_to_ptr.hbm [resolvable:$true] %s49
      %s51 = sshll.u32 [#allocation8], 4
      %s52 = int_to_ptr.vmem [resolvable:$true] %s51
      %57 = dma.hbm_to_vmem [thread:$0]  %s50, 6144, %s52, [#allocation7], 384, 384, 24
    $region13: #{tpu_custom_call.1} parent=1 // pred_fallthru
      _
    // Predicated region
    $region14: #{tpu_custom_call.1} parent=1 // pred_check
      _
    $region15: #{tpu_custom_call.1} parent=1 // pred_check_branch
      %59 = sbr.rel (0) target = $region17
    $region16: #{tpu_custom_call.1} parent=1 // pred_region
      %61 = vsyncadd [#allocation10], 0
      %s63 = sshll.u32 %s3, 4
      %s64 = int_to_ptr.hbm [resolvable:$true] %s63
      %s65 = sshll.u32 [#allocation9], 4
      %s66 = int_to_ptr.vmem [resolvable:$true] %s65
      %68 = dma.hbm_to_vmem [thread:$0]  %s64, 48, %s66, [#allocation10]
    $region17: #{tpu_custom_call.1} parent=1 // pred_fallthru
      _
    // Predicated region
    $region18: #{tpu_custom_call.1} parent=1 // pred_check
      _
    $region19: #{tpu_custom_call.1} parent=1 // pred_check_branch
      %70 = sbr.rel (0) target = $region21
    $region20: #{tpu_custom_call.1} parent=1 // pred_region
      %72 = vsyncadd [#allocation10], 0
      %s73 = sshll.u32 %s4, 4
      %s74 = int_to_ptr.hbm [resolvable:$true] %s73
      %s75 = sshll.u32 [#allocation11], 4
      %s76 = int_to_ptr.vmem [resolvable:$true] %s75
      %81 = dma.hbm_to_vmem [thread:$0]  %s74, 6144, %s76, [#allocation10], 384, 384, 24
    $region21: #{tpu_custom_call.1} parent=1 // pred_fallthru
      _
    // Predicated region
    $region22: #{tpu_custom_call.1} parent=1 // pred_check
      _
    $region23: #{tpu_custom_call.1} parent=1 // pred_check_branch
      %83 = sbr.rel (0) target = $region25
    $region24: #{tpu_custom_call.1} parent=1 // pred_region
      _
    $region25: #{tpu_custom_call.1} parent=1 // pred_fallthru
      _
    // Predicated region
    $region26: #{tpu_custom_call.1} parent=1 // pred_check
      _
    $region27: #{tpu_custom_call.1} parent=1 // pred_check_branch
      %85 = sbr.rel (0) target = $region29
    $region28: #{tpu_custom_call.1} parent=1 // pred_region
      %87 = vsyncadd [#allocation13], 0
      %s88 = sshll.u32 %s6, 4
      %s89 = int_to_ptr.hbm [resolvable:$true] %s88
      %s90 = sshll.u32 [#allocation12], 4
      %s91 = int_to_ptr.vmem [resolvable:$true] %s90
      %96 = dma.hbm_to_vmem [thread:$0]  %s89, 2048, %s91, [#allocation13], 128, 128, 8
    $region29: #{tpu_custom_call.1} parent=1 // pred_fallthru
      _
    // Predicated region
    $region30: #{tpu_custom_call.1} parent=1 // pred_check
      _
    $region31: #{tpu_custom_call.1} parent=1 // pred_check_branch
      %98 = sbr.rel (0) target = $region33
    $region32: #{tpu_custom_call.1} parent=1 // pred_region
      _
    $region33: #{tpu_custom_call.1} parent=1 // pred_fallthru
      _
    // Predicated region
    $region34: #{tpu_custom_call.1} parent=1 // pred_check
      _
    $region35: #{tpu_custom_call.1} parent=1 // pred_check_branch
      %100 = sbr.rel (0) target = $region37
    $region36: #{tpu_custom_call.1} parent=1 // pred_region
      %102 = dma.done [#allocation4], 1024
    $region37: #{tpu_custom_call.1} parent=1 // pred_fallthru
      _
    // Predicated region
    $region38: #{tpu_custom_call.1} parent=1 // pred_check
      _
    $region39: #{tpu_custom_call.1} parent=1 // pred_check_branch
      %104 = sbr.rel (0) target = $region41
    $region40: #{tpu_custom_call.1} parent=1 // pred_region
      %106 = dma.done [#allocation7], 128
    $region41: #{tpu_custom_call.1} parent=1 // pred_fallthru
      _
    // Predicated region
    $region42: #{tpu_custom_call.1} parent=1 // pred_check
      _
    $region43: #{tpu_custom_call.1} parent=1 // pred_check_branch
      %108 = sbr.rel (0) target = $region45
    $region44: #{tpu_custom_call.1} parent=1 // pred_region
      %110 = dma.done [#allocation7], 6144
    $region45: #{tpu_custom_call.1} parent=1 // pred_fallthru
      _
    // Predicated region
    $region46: #{tpu_custom_call.1} parent=1 // pred_check
      _
    $region47: #{tpu_custom_call.1} parent=1 // pred_check_branch
      %112 = sbr.rel (0) target = $region49
    $region48: #{tpu_custom_call.1} parent=1 // pred_region
      %114 = dma.done [#allocation10], 48
    $region49: #{tpu_custom_call.1} parent=1 // pred_fallthru
      _
    // Predicated region
    $region50: #{tpu_custom_call.1} parent=1 // pred_check
      _
    $region51: #{tpu_custom_call.1} parent=1 // pred_check_branch
      %116 = sbr.rel (0) target = $region53
    $region52: #{tpu_custom_call.1} parent=1 // pred_region
      %118 = dma.done [#allocation10], 6144
    $region53: #{tpu_custom_call.1} parent=1 // pred_fallthru
      _
    // Predicated region
    $region54: #{tpu_custom_call.1} parent=1 // pred_check
      _
    $region55: #{tpu_custom_call.1} parent=1 // pred_check_branch
      %120 = sbr.rel (0) target = $region57
    $region56: #{tpu_custom_call.1} parent=1 // pred_region
      %122 = dma.done [#allocation13], 2048
    $region57: #{tpu_custom_call.1} parent=1 // pred_fallthru
      _
    %p123 = scmp.eq.s32.totalorder 0, 0
    // Predicated region
    $region58: #{tpu_custom_call.1} parent=1 // pred_check
      %p124 = pneg %p123
    $region59: #{tpu_custom_call.1} parent=1 // pred_check_branch
      %126 = sbr.rel (%p124) target = $region61
    $region60: #{tpu_custom_call.1} parent=1 // pred_region
      %v127 = vld [vmem:[#allocation6] sm:$0xff]
      %128 = vst [vmem:[#allocation2] sm:$0xff] %v127
    $region61: #{tpu_custom_call.1} parent=1 // pred_fallthru
      _
    %v129 = vld [vmem:[#allocation3] sm:$0xff]
    %v130 = vld [vmem:[#allocation3 + $0x8] sm:$0xff]
    %v131 = vld [vmem:[#allocation3 + $0x10] sm:$0xff]
    %v132 = vld [vmem:[#allocation3 + $0x18] sm:$0xff]
    %v133 = vld [vmem:[#allocation3 + $0x20] sm:$0xff]
    %v134 = vld [vmem:[#allocation3 + $0x28] sm:$0xff]
    %v135 = vld [vmem:[#allocation3 + $0x30] sm:$0xff]
    %v136 = vld [vmem:[#allocation3 + $0x38] sm:$0xff]
    %v137 = vld [vmem:[#allocation8] sm:$0xff]
    %v138 = vld [vmem:[#allocation8 + $0x8] sm:$0xff]
    %v139 = vld [vmem:[#allocation8 + $0x10] sm:$0xff]
    %v140 = vld [vmem:[#allocation8 + $0x18] sm:$0xff]
    %v141 = vld [vmem:[#allocation8 + $0x20] sm:$0xff]
    %v142 = vld [vmem:[#allocation8 + $0x28] sm:$0xff]
    %v143 = vld [vmem:[#allocation8 + $0x30] sm:$0xff]
    %v144 = vld [vmem:[#allocation8 + $0x38] sm:$0xff]
    %v145 = vld [vmem:[#allocation8 + $0x40] sm:$0xff]
    %v146 = vld [vmem:[#allocation8 + $0x48] sm:$0xff]
    %v147 = vld [vmem:[#allocation8 + $0x50] sm:$0xff]
    %v148 = vld [vmem:[#allocation8 + $0x58] sm:$0xff]
    %v149 = vld [vmem:[#allocation8 + $0x60] sm:$0xff]
    %v150 = vld [vmem:[#allocation8 + $0x68] sm:$0xff]
    %v151 = vld [vmem:[#allocation8 + $0x70] sm:$0xff]
    %v152 = vld [vmem:[#allocation8 + $0x78] sm:$0xff]
    %v153 = vld [vmem:[#allocation8 + $0x80] sm:$0xff]
    %v154 = vld [vmem:[#allocation8 + $0x88] sm:$0xff]
    %v155 = vld [vmem:[#allocation8 + $0x90] sm:$0xff]
    %v156 = vld [vmem:[#allocation8 + $0x98] sm:$0xff]
    %v157 = vld [vmem:[#allocation8 + $0xa0] sm:$0xff]
    %v158 = vld [vmem:[#allocation8 + $0xa8] sm:$0xff]
    %v159 = vld [vmem:[#allocation8 + $0xb0] sm:$0xff]
    %v160 = vld [vmem:[#allocation8 + $0xb8] sm:$0xff]
    %v161 = vld [vmem:[#allocation8 + $0xc0] sm:$0xff]
    %v162 = vld [vmem:[#allocation8 + $0xc8] sm:$0xff]
    %v163 = vld [vmem:[#allocation8 + $0xd0] sm:$0xff]
    %v164 = vld [vmem:[#allocation8 + $0xd8] sm:$0xff]
    %v165 = vld [vmem:[#allocation8 + $0xe0] sm:$0xff]
    %v166 = vld [vmem:[#allocation8 + $0xe8] sm:$0xff]
    %v167 = vld [vmem:[#allocation8 + $0xf0] sm:$0xff]
    %v168 = vld [vmem:[#allocation8 + $0xf8] sm:$0xff]
    %v169 = vld [vmem:[#allocation8 + $0x100] sm:$0xff]
    %v170 = vld [vmem:[#allocation8 + $0x108] sm:$0xff]
    %v171 = vld [vmem:[#allocation8 + $0x110] sm:$0xff]
    %v172 = vld [vmem:[#allocation8 + $0x118] sm:$0xff]
    %v173 = vld [vmem:[#allocation8 + $0x120] sm:$0xff]
    %v174 = vld [vmem:[#allocation8 + $0x128] sm:$0xff]
    %v175 = vld [vmem:[#allocation8 + $0x130] sm:$0xff]
    %v176 = vld [vmem:[#allocation8 + $0x138] sm:$0xff]
    %v177 = vld [vmem:[#allocation8 + $0x140] sm:$0xff]
    %v178 = vld [vmem:[#allocation8 + $0x148] sm:$0xff]
    %v179 = vld [vmem:[#allocation8 + $0x150] sm:$0xff]
    %v180 = vld [vmem:[#allocation8 + $0x158] sm:$0xff]
    %v181 = vld [vmem:[#allocation8 + $0x160] sm:$0xff]
    %v182 = vld [vmem:[#allocation8 + $0x168] sm:$0xff]
    %v183 = vld [vmem:[#allocation8 + $0x170] sm:$0xff]
    %v184 = vld [vmem:[#allocation8 + $0x178] sm:$0xff]
    %v185 = vld [vmem:[#allocation9] sm:$0x7]
    %v187 = vperm.slane %v185, 0
    %v188 = vperm.slane %v185, 1
    %v189 = vperm.slane %v185, 2
    %193 = vmatpush.msra.mxu0 %v182
    %194 = vmatpush.msra.mxu0 %v179
    %195 = vmatpush.msra.mxu0 %v176
    %196 = vmatpush.msra.mxu0 %v173
    %197 = vmatpush.msra.mxu0 %v170
    %198 = vmatpush.msra.mxu0 %v167
    %199 = vmatpush.msra.mxu0 %v164
    %200 = vmatpush.msra.mxu0 %v161
    %201 = vmatpush.msra.mxu0 %v158
    %202 = vmatpush.msra.mxu0 %v155
    %203 = vmatpush.msra.mxu0 %v152
    %204 = vmatpush.msra.mxu0 %v149
    %205 = vmatpush.msra.mxu0 %v146
    %206 = vmatpush.msra.mxu0 %v143
    %207 = vmatpush.msra.mxu0 %v140
    %208 = vmatpush.msra.mxu0 %v137
    %209 = vmatmul.f32.gmra.mxu0 %v129
    %v210 = vpop.f32.mrf.mxu0
    %v211 = vadd.f32 %v187, %v210
    %212 = vmatmul.f32.gmra.mxu0 %v130
    %v213 = vpop.f32.mrf.mxu0
    %v214 = vadd.f32 %v187, %v213
    %215 = vmatmul.f32.gmra.mxu0 %v131
    %v216 = vpop.f32.mrf.mxu0
    %v217 = vadd.f32 %v187, %v216
    %218 = vmatmul.f32.gmra.mxu0 %v132
    %v219 = vpop.f32.mrf.mxu0
    %v220 = vadd.f32 %v187, %v219
    %221 = vmatmul.f32.gmra.mxu0 %v133
    %v222 = vpop.f32.mrf.mxu0
    %v223 = vadd.f32 %v187, %v222
    %224 = vmatmul.f32.gmra.mxu0 %v134
    %v225 = vpop.f32.mrf.mxu0
    %v226 = vadd.f32 %v187, %v225
    %227 = vmatmul.f32.gmra.mxu0 %v135
    %v228 = vpop.f32.mrf.mxu0
    %v229 = vadd.f32 %v187, %v228
    %230 = vmatmul.f32.gmra.mxu0 %v136
    %v231 = vpop.f32.mrf.mxu0
    %v232 = vadd.f32 %v187, %v231
    %233 = vdwg.mxu0
    %234 = vmatpush.msra.mxu0 %v183
    %235 = vmatpush.msra.mxu0 %v180
    %236 = vmatpush.msra.mxu0 %v177
    %237 = vmatpush.msra.mxu0 %v174
    %238 = vmatpush.msra.mxu0 %v171
    %239 = vmatpush.msra.mxu0 %v168
    %240 = vmatpush.msra.mxu0 %v165
    %241 = vmatpush.msra.mxu0 %v162
    %242 = vmatpush.msra.mxu0 %v159
    %243 = vmatpush.msra.mxu0 %v156
    %244 = vmatpush.msra.mxu0 %v153
    %245 = vmatpush.msra.mxu0 %v150
    %246 = vmatpush.msra.mxu0 %v147
    %247 = vmatpush.msra.mxu0 %v144
    %248 = vmatpush.msra.mxu0 %v141
    %249 = vmatpush.msra.mxu0 %v138
    %250 = vmatmul.f32.gmra.mxu0 %v129
    %v251 = vpop.f32.mrf.mxu0
    %v252 = vadd.f32 %v188, %v251
    %253 = vmatmul.f32.gmra.mxu0 %v130
    %v254 = vpop.f32.mrf.mxu0
    %v255 = vadd.f32 %v188, %v254
    %256 = vmatmul.f32.gmra.mxu0 %v131
    %v257 = vpop.f32.mrf.mxu0
    %v258 = vadd.f32 %v188, %v257
    %259 = vmatmul.f32.gmra.mxu0 %v132
    %v260 = vpop.f32.mrf.mxu0
    %v261 = vadd.f32 %v188, %v260
    %262 = vmatmul.f32.gmra.mxu0 %v133
    %v263 = vpop.f32.mrf.mxu0
    %v264 = vadd.f32 %v188, %v263
    %265 = vmatmul.f32.gmra.mxu0 %v134
    %v266 = vpop.f32.mrf.mxu0
    %v267 = vadd.f32 %v188, %v266
    %268 = vmatmul.f32.gmra.mxu0 %v135
    %v269 = vpop.f32.mrf.mxu0
    %v270 = vadd.f32 %v188, %v269
    %271 = vmatmul.f32.gmra.mxu0 %v136
    %v272 = vpop.f32.mrf.mxu0
    %v273 = vadd.f32 %v188, %v272
    %274 = vdwg.mxu0
    %275 = vmatpush.msra.mxu0 %v184
    %276 = vmatpush.msra.mxu0 %v181
    %277 = vmatpush.msra.mxu0 %v178
    %278 = vmatpush.msra.mxu0 %v175
    %279 = vmatpush.msra.mxu0 %v172
    %280 = vmatpush.msra.mxu0 %v169
    %281 = vmatpush.msra.mxu0 %v166
    %282 = vmatpush.msra.mxu0 %v163
    %283 = vmatpush.msra.mxu0 %v160
    %284 = vmatpush.msra.mxu0 %v157
    %285 = vmatpush.msra.mxu0 %v154
    %286 = vmatpush.msra.mxu0 %v151
    %287 = vmatpush.msra.mxu0 %v148
    %288 = vmatpush.msra.mxu0 %v145
    %289 = vmatpush.msra.mxu0 %v142
    %290 = vmatpush.msra.mxu0 %v139
    %291 = vmatmul.f32.gmra.mxu0 %v129
    %v292 = vpop.f32.mrf.mxu0
    %v293 = vadd.f32 %v189, %v292
    %294 = vmatmul.f32.gmra.mxu0 %v130
    %v295 = vpop.f32.mrf.mxu0
    %v296 = vadd.f32 %v189, %v295
    %297 = vmatmul.f32.gmra.mxu0 %v131
    %v298 = vpop.f32.mrf.mxu0
    %v299 = vadd.f32 %v189, %v298
    %300 = vmatmul.f32.gmra.mxu0 %v132
    %v301 = vpop.f32.mrf.mxu0
    %v302 = vadd.f32 %v189, %v301
    %303 = vmatmul.f32.gmra.mxu0 %v133
    %v304 = vpop.f32.mrf.mxu0
    %v305 = vadd.f32 %v189, %v304
    %306 = vmatmul.f32.gmra.mxu0 %v134
    %v307 = vpop.f32.mrf.mxu0
    %v308 = vadd.f32 %v189, %v307
    %309 = vmatmul.f32.gmra.mxu0 %v135
    %v310 = vpop.f32.mrf.mxu0
    %v311 = vadd.f32 %v189, %v310
    %312 = vmatmul.f32.gmra.mxu0 %v136
    %v313 = vpop.f32.mrf.mxu0
    %v314 = vadd.f32 %v189, %v313
    %315 = vdwg.mxu0
    %v316 = vld [vmem:[#allocation11] sm:$0xff]
    %v317 = vld [vmem:[#allocation11 + $0x8] sm:$0xff]
    %v318 = vld [vmem:[#allocation11 + $0x10] sm:$0xff]
    %v319 = vld [vmem:[#allocation11 + $0x18] sm:$0xff]
    %v320 = vld [vmem:[#allocation11 + $0x20] sm:$0xff]
    %v321 = vld [vmem:[#allocation11 + $0x28] sm:$0xff]
    %v322 = vld [vmem:[#allocation11 + $0x30] sm:$0xff]
    %v323 = vld [vmem:[#allocation11 + $0x38] sm:$0xff]
    %v324 = vld [vmem:[#allocation11 + $0x40] sm:$0xff]
    %v325 = vld [vmem:[#allocation11 + $0x48] sm:$0xff]
    %v326 = vld [vmem:[#allocation11 + $0x50] sm:$0xff]
    %v327 = vld [vmem:[#allocation11 + $0x58] sm:$0xff]
    %v328 = vld [vmem:[#allocation11 + $0x60] sm:$0xff]
    %v329 = vld [vmem:[#allocation11 + $0x68] sm:$0xff]
    %v330 = vld [vmem:[#allocation11 + $0x70] sm:$0xff]
    %v331 = vld [vmem:[#allocation11 + $0x78] sm:$0xff]
    %v332 = vld [vmem:[#allocation11 + $0x80] sm:$0xff]
    %v333 = vld [vmem:[#allocation11 + $0x88] sm:$0xff]
    %v334 = vld [vmem:[#allocation11 + $0x90] sm:$0xff]
    %v335 = vld [vmem:[#allocation11 + $0x98] sm:$0xff]
    %v336 = vld [vmem:[#allocation11 + $0xa0] sm:$0xff]
    %v337 = vld [vmem:[#allocation11 + $0xa8] sm:$0xff]
    %v338 = vld [vmem:[#allocation11 + $0xb0] sm:$0xff]
    %v339 = vld [vmem:[#allocation11 + $0xb8] sm:$0xff]
    %v340 = vld [vmem:[#allocation11 + $0xc0] sm:$0xff]
    %v341 = vld [vmem:[#allocation11 + $0xc8] sm:$0xff]
    %v342 = vld [vmem:[#allocation11 + $0xd0] sm:$0xff]
    %v343 = vld [vmem:[#allocation11 + $0xd8] sm:$0xff]
    %v344 = vld [vmem:[#allocation11 + $0xe0] sm:$0xff]
    %v345 = vld [vmem:[#allocation11 + $0xe8] sm:$0xff]
    %v346 = vld [vmem:[#allocation11 + $0xf0] sm:$0xff]
    %v347 = vld [vmem:[#allocation11 + $0xf8] sm:$0xff]
    %v348 = vld [vmem:[#allocation11 + $0x100] sm:$0xff]
    %v349 = vld [vmem:[#allocation11 + $0x108] sm:$0xff]
    %v350 = vld [vmem:[#allocation11 + $0x110] sm:$0xff]
    %v351 = vld [vmem:[#allocation11 + $0x118] sm:$0xff]
    %v352 = vld [vmem:[#allocation11 + $0x120] sm:$0xff]
    %v353 = vld [vmem:[#allocation11 + $0x128] sm:$0xff]
    %v354 = vld [vmem:[#allocation11 + $0x130] sm:$0xff]
    %v355 = vld [vmem:[#allocation11 + $0x138] sm:$0xff]
    %v356 = vld [vmem:[#allocation11 + $0x140] sm:$0xff]
    %v357 = vld [vmem:[#allocation11 + $0x148] sm:$0xff]
    %v358 = vld [vmem:[#allocation11 + $0x150] sm:$0xff]
    %v359 = vld [vmem:[#allocation11 + $0x158] sm:$0xff]
    %v360 = vld [vmem:[#allocation11 + $0x160] sm:$0xff]
    %v361 = vld [vmem:[#allocation11 + $0x168] sm:$0xff]
    %v362 = vld [vmem:[#allocation11 + $0x170] sm:$0xff]
    %v363 = vld [vmem:[#allocation11 + $0x178] sm:$0xff]
    %v364 = vld [vmem:[%s5] sm:$0x1]
    %v366 = vperm.slane %v364, 0
    %v368 = vld [vmem:[#allocation2] sm:$0xff]
    %369 = vmatpush.msra.mxu0 %v361
    %370 = vmatpush.msra.mxu0 %v358
    %371 = vmatpush.msra.mxu0 %v355
    %372 = vmatpush.msra.mxu0 %v352
    %373 = vmatpush.msra.mxu0 %v349
    %374 = vmatpush.msra.mxu0 %v346
    %375 = vmatpush.msra.mxu0 %v343
    %376 = vmatpush.msra.mxu0 %v340
    %377 = vmatpush.msra.mxu0 %v337
    %378 = vmatpush.msra.mxu0 %v334
    %379 = vmatpush.msra.mxu0 %v331
    %380 = vmatpush.msra.mxu0 %v328
    %381 = vmatpush.msra.mxu0 %v325
    %382 = vmatpush.msra.mxu0 %v322
    %383 = vmatpush.msra.mxu0 %v319
    %384 = vmatpush.msra.mxu0 %v316
    %385 = vmatmul.f32.gmra.mxu0 %v368
    %v386 = vpop.f32.mrf.mxu0
    %v387 = vadd.f32 0.0, %v386
    %388 = vdwg.mxu0
    %389 = vmatpush.msra.mxu0 %v362
    %390 = vmatpush.msra.mxu0 %v359
    %391 = vmatpush.msra.mxu0 %v356
    %392 = vmatpush.msra.mxu0 %v353
    %393 = vmatpush.msra.mxu0 %v350
    %394 = vmatpush.msra.mxu0 %v347
    %395 = vmatpush.msra.mxu0 %v344
    %396 = vmatpush.msra.mxu0 %v341
    %397 = vmatpush.msra.mxu0 %v338
    %398 = vmatpush.msra.mxu0 %v335
    %399 = vmatpush.msra.mxu0 %v332
    %400 = vmatpush.msra.mxu0 %v329
    %401 = vmatpush.msra.mxu0 %v326
    %402 = vmatpush.msra.mxu0 %v323
    %403 = vmatpush.msra.mxu0 %v320
    %404 = vmatpush.msra.mxu0 %v317
    %405 = vmatmul.f32.gmra.mxu0 %v368
    %v406 = vpop.f32.mrf.mxu0
    %v407 = vadd.f32 0.0, %v406
    %408 = vdwg.mxu0
    %409 = vmatpush.msra.mxu0 %v363
    %410 = vmatpush.msra.mxu0 %v360
    %411 = vmatpush.msra.mxu0 %v357
    %412 = vmatpush.msra.mxu0 %v354
    %413 = vmatpush.msra.mxu0 %v351
    %414 = vmatpush.msra.mxu0 %v348
    %415 = vmatpush.msra.mxu0 %v345
    %416 = vmatpush.msra.mxu0 %v342
    %417 = vmatpush.msra.mxu0 %v339
    %418 = vmatpush.msra.mxu0 %v336
    %419 = vmatpush.msra.mxu0 %v333
    %420 = vmatpush.msra.mxu0 %v330
    %421 = vmatpush.msra.mxu0 %v327
    %422 = vmatpush.msra.mxu0 %v324
    %423 = vmatpush.msra.mxu0 %v321
    %424 = vmatpush.msra.mxu0 %v318
    %425 = vmatmul.f32.gmra.mxu0 %v368
    %v426 = vpop.f32.mrf.mxu0
    %v427 = vadd.f32 0.0, %v426
    %428 = vdwg.mxu0
    %v429 = vadd.f32 %v211, %v387
    %v430 = vxor.u32 %v429, 2147483648
    %v431 = vmul.f32 %v430, 1.442695
    %v432 = vpow.pop %v431
    %v433 = vadd.f32 %v432, 1.0
    %v434 = vrcp.pop %v433
    %v435 = vmul.f32 %v433, %v434
    %v436 = vsub.f32 1.0, %v435
    %v437 = vmul.f32 %v434, %v436
    %v438 = vadd.f32 %v434, %v437
    %vm439 = vweird.f32 %v433
    %vm440 = vweird.f32 %v434
    %vm441 = vmor %vm439, %vm440
    %v442 = vsel %vm441, %v434, %v438
    %v443 = vand.u32 2147483647, %v433
    %vm444 = vcmp.eq.f32.partialorder %v443, 8.507059e+37
    %v445 = vand.u32 %v433, 2147483648
    %v446 = vor.u32 1.1754944e-38, %v445
    %v447 = vsel %vm444, %v446, %v442
    %v448 = vmul.f32 1.0, %v447
    %v449 = vadd.f32 %v252, %v407
    %v450 = vxor.u32 %v449, 2147483648
    %v451 = vmul.f32 %v450, 1.442695
    %v452 = vpow.pop %v451
    %v453 = vadd.f32 %v452, 1.0
    %v454 = vrcp.pop %v453
    %v455 = vmul.f32 %v453, %v454
    %v456 = vsub.f32 1.0, %v455
    %v457 = vmul.f32 %v454, %v456
    %v458 = vadd.f32 %v454, %v457
    %vm459 = vweird.f32 %v453
    %vm460 = vweird.f32 %v454
    %vm461 = vmor %vm459, %vm460
    %v462 = vsel %vm461, %v454, %v458
    %v463 = vand.u32 2147483647, %v453
    %vm464 = vcmp.eq.f32.partialorder %v463, 8.507059e+37
    %v465 = vand.u32 %v453, 2147483648
    %v466 = vor.u32 1.1754944e-38, %v465
    %v467 = vsel %vm464, %v466, %v462
    %v468 = vmul.f32 1.0, %v467
    %v469 = vadd.f32 %v427, %v366
    %v470 = vmul.f32 %v448, %v469
    %v471 = vadd.f32 %v293, %v470
    %v472 = vtanh.pop %v471
    %v473 = vsub.f32 %v368, %v472
    %v474 = vmul.f32 %v468, %v473
    %v475 = vadd.f32 %v472, %v474
    %476 = vmatpush.msra.mxu0 %v361
    %477 = vmatpush.msra.mxu0 %v358
    %478 = vmatpush.msra.mxu0 %v355
    %479 = vmatpush.msra.mxu0 %v352
    %480 = vmatpush.msra.mxu0 %v349
    %481 = vmatpush.msra.mxu0 %v346
    %482 = vmatpush.msra.mxu0 %v343
    %483 = vmatpush.msra.mxu0 %v340
    %484 = vmatpush.msra.mxu0 %v337
    %485 = vmatpush.msra.mxu0 %v334
    %486 = vmatpush.msra.mxu0 %v331
    %487 = vmatpush.msra.mxu0 %v328
    %488 = vmatpush.msra.mxu0 %v325
    %489 = vmatpush.msra.mxu0 %v322
    %490 = vmatpush.msra.mxu0 %v319
    %491 = vmatpush.msra.mxu0 %v316
    %492 = vmatmul.f32.gmra.mxu0 %v475
    %v493 = vpop.f32.mrf.mxu0
    %v494 = vadd.f32 0.0, %v493
    %495 = vdwg.mxu0
    %496 = vmatpush.msra.mxu0 %v362
    %497 = vmatpush.msra.mxu0 %v359
    %498 = vmatpush.msra.mxu0 %v356
    %499 = vmatpush.msra.mxu0 %v353
    %500 = vmatpush.msra.mxu0 %v350
    %501 = vmatpush.msra.mxu0 %v347
    %502 = vmatpush.msra.mxu0 %v344
    %503 = vmatpush.msra.mxu0 %v341
    %504 = vmatpush.msra.mxu0 %v338
    %505 = vmatpush.msra.mxu0 %v335
    %506 = vmatpush.msra.mxu0 %v332
    %507 = vmatpush.msra.mxu0 %v329
    %508 = vmatpush.msra.mxu0 %v326
    %509 = vmatpush.msra.mxu0 %v323
    %510 = vmatpush.msra.mxu0 %v320
    %511 = vmatpush.msra.mxu0 %v317
    %512 = vmatmul.f32.gmra.mxu0 %v475
    %v513 = vpop.f32.mrf.mxu0
    %v514 = vadd.f32 0.0, %v513
    %515 = vdwg.mxu0
    %516 = vmatpush.msra.mxu0 %v363
    %517 = vmatpush.msra.mxu0 %v360
    %518 = vmatpush.msra.mxu0 %v357
    %519 = vmatpush.msra.mxu0 %v354
    %520 = vmatpush.msra.mxu0 %v351
    %521 = vmatpush.msra.mxu0 %v348
    %522 = vmatpush.msra.mxu0 %v345
    %523 = vmatpush.msra.mxu0 %v342
    %524 = vmatpush.msra.mxu0 %v339
    %525 = vmatpush.msra.mxu0 %v336
    %526 = vmatpush.msra.mxu0 %v333
    %527 = vmatpush.msra.mxu0 %v330
    %528 = vmatpush.msra.mxu0 %v327
    %529 = vmatpush.msra.mxu0 %v324
    %530 = vmatpush.msra.mxu0 %v321
    %531 = vmatpush.msra.mxu0 %v318
    %532 = vmatmul.f32.gmra.mxu0 %v475
    %v533 = vpop.f32.mrf.mxu0
    %v534 = vadd.f32 0.0, %v533
    %535 = vdwg.mxu0
    %v536 = vadd.f32 %v214, %v494
    %v537 = vxor.u32 %v536, 2147483648
    %v538 = vmul.f32 %v537, 1.442695
    %v539 = vpow.pop %v538
    %v540 = vadd.f32 %v539, 1.0
    %v541 = vrcp.pop %v540
    %v542 = vmul.f32 %v540, %v541
    %v543 = vsub.f32 1.0, %v542
    %v544 = vmul.f32 %v541, %v543
    %v545 = vadd.f32 %v541, %v544
    %vm546 = vweird.f32 %v540
    %vm547 = vweird.f32 %v541
    %vm548 = vmor %vm546, %vm547
    %v549 = vsel %vm548, %v541, %v545
    %v550 = vand.u32 2147483647, %v540
    %vm551 = vcmp.eq.f32.partialorder %v550, 8.507059e+37
    %v552 = vand.u32 %v540, 2147483648
    %v553 = vor.u32 1.1754944e-38, %v552
    %v554 = vsel %vm551, %v553, %v549
    %v555 = vmul.f32 1.0, %v554
    %v556 = vadd.f32 %v255, %v514
    %v557 = vxor.u32 %v556, 2147483648
    %v558 = vmul.f32 %v557, 1.442695
    %v559 = vpow.pop %v558
    %v560 = vadd.f32 %v559, 1.0
    %v561 = vrcp.pop %v560
    %v562 = vmul.f32 %v560, %v561
    %v563 = vsub.f32 1.0, %v562
    %v564 = vmul.f32 %v561, %v563
    %v565 = vadd.f32 %v561, %v564
    %vm566 = vweird.f32 %v560
    %vm567 = vweird.f32 %v561
    %vm568 = vmor %vm566, %vm567
    %v569 = vsel %vm568, %v561, %v565
    %v570 = vand.u32 2147483647, %v560
    %vm571 = vcmp.eq.f32.partialorder %v570, 8.507059e+37
    %v572 = vand.u32 %v560, 2147483648
    %v573 = vor.u32 1.1754944e-38, %v572
    %v574 = vsel %vm571, %v573, %v569
    %v575 = vmul.f32 1.0, %v574
    %v576 = vadd.f32 %v534, %v366
    %v577 = vmul.f32 %v555, %v576
    %v578 = vadd.f32 %v296, %v577
    %v579 = vtanh.pop %v578
    %v580 = vsub.f32 %v475, %v579
    %v581 = vmul.f32 %v575, %v580
    %v582 = vadd.f32 %v579, %v581
    %583 = vmatpush.msra.mxu0 %v361
    %584 = vmatpush.msra.mxu0 %v358
    %585 = vmatpush.msra.mxu0 %v355
    %586 = vmatpush.msra.mxu0 %v352
    %587 = vmatpush.msra.mxu0 %v349
    %588 = vmatpush.msra.mxu0 %v346
    %589 = vmatpush.msra.mxu0 %v343
    %590 = vmatpush.msra.mxu0 %v340
    %591 = vmatpush.msra.mxu0 %v337
    %592 = vmatpush.msra.mxu0 %v334
    %593 = vmatpush.msra.mxu0 %v331
    %594 = vmatpush.msra.mxu0 %v328
    %595 = vmatpush.msra.mxu0 %v325
    %596 = vmatpush.msra.mxu0 %v322
    %597 = vmatpush.msra.mxu0 %v319
    %598 = vmatpush.msra.mxu0 %v316
    %599 = vmatmul.f32.gmra.mxu0 %v582
    %v600 = vpop.f32.mrf.mxu0
    %v601 = vadd.f32 0.0, %v600
    %602 = vdwg.mxu0
    %603 = vmatpush.msra.mxu0 %v362
    %604 = vmatpush.msra.mxu0 %v359
    %605 = vmatpush.msra.mxu0 %v356
    %606 = vmatpush.msra.mxu0 %v353
    %607 = vmatpush.msra.mxu0 %v350
    %608 = vmatpush.msra.mxu0 %v347
    %609 = vmatpush.msra.mxu0 %v344
    %610 = vmatpush.msra.mxu0 %v341
    %611 = vmatpush.msra.mxu0 %v338
    %612 = vmatpush.msra.mxu0 %v335
    %613 = vmatpush.msra.mxu0 %v332
    %614 = vmatpush.msra.mxu0 %v329
    %615 = vmatpush.msra.mxu0 %v326
    %616 = vmatpush.msra.mxu0 %v323
    %617 = vmatpush.msra.mxu0 %v320
    %618 = vmatpush.msra.mxu0 %v317
    %619 = vmatmul.f32.gmra.mxu0 %v582
    %v620 = vpop.f32.mrf.mxu0
    %v621 = vadd.f32 0.0, %v620
    %622 = vdwg.mxu0
    %623 = vmatpush.msra.mxu0 %v363
    %624 = vmatpush.msra.mxu0 %v360
    %625 = vmatpush.msra.mxu0 %v357
    %626 = vmatpush.msra.mxu0 %v354
    %627 = vmatpush.msra.mxu0 %v351
    %628 = vmatpush.msra.mxu0 %v348
    %629 = vmatpush.msra.mxu0 %v345
    %630 = vmatpush.msra.mxu0 %v342
    %631 = vmatpush.msra.mxu0 %v339
    %632 = vmatpush.msra.mxu0 %v336
    %633 = vmatpush.msra.mxu0 %v333
    %634 = vmatpush.msra.mxu0 %v330
    %635 = vmatpush.msra.mxu0 %v327
    %636 = vmatpush.msra.mxu0 %v324
    %637 = vmatpush.msra.mxu0 %v321
    %638 = vmatpush.msra.mxu0 %v318
    %639 = vmatmul.f32.gmra.mxu0 %v582
    %v640 = vpop.f32.mrf.mxu0
    %v641 = vadd.f32 0.0, %v640
    %642 = vdwg.mxu0
    %v643 = vadd.f32 %v217, %v601
    %v644 = vxor.u32 %v643, 2147483648
    %v645 = vmul.f32 %v644, 1.442695
    %v646 = vpow.pop %v645
    %v647 = vadd.f32 %v646, 1.0
    %v648 = vrcp.pop %v647
    %v649 = vmul.f32 %v647, %v648
    %v650 = vsub.f32 1.0, %v649
    %v651 = vmul.f32 %v648, %v650
    %v652 = vadd.f32 %v648, %v651
    %vm653 = vweird.f32 %v647
    %vm654 = vweird.f32 %v648
    %vm655 = vmor %vm653, %vm654
    %v656 = vsel %vm655, %v648, %v652
    %v657 = vand.u32 2147483647, %v647
    %vm658 = vcmp.eq.f32.partialorder %v657, 8.507059e+37
    %v659 = vand.u32 %v647, 2147483648
    %v660 = vor.u32 1.1754944e-38, %v659
    %v661 = vsel %vm658, %v660, %v656
    %v662 = vmul.f32 1.0, %v661
    %v663 = vadd.f32 %v258, %v621
    %v664 = vxor.u32 %v663, 2147483648
    %v665 = vmul.f32 %v664, 1.442695
    %v666 = vpow.pop %v665
    %v667 = vadd.f32 %v666, 1.0
    %v668 = vrcp.pop %v667
    %v669 = vmul.f32 %v667, %v668
    %v670 = vsub.f32 1.0, %v669
    %v671 = vmul.f32 %v668, %v670
    %v672 = vadd.f32 %v668, %v671
    %vm673 = vweird.f32 %v667
    %vm674 = vweird.f32 %v668
    %vm675 = vmor %vm673, %vm674
    %v676 = vsel %vm675, %v668, %v672
    %v677 = vand.u32 2147483647, %v667
    %vm678 = vcmp.eq.f32.partialorder %v677, 8.507059e+37
    %v679 = vand.u32 %v667, 2147483648
    %v680 = vor.u32 1.1754944e-38, %v679
    %v681 = vsel %vm678, %v680, %v676
    %v682 = vmul.f32 1.0, %v681
    %v683 = vadd.f32 %v641, %v366
    %v684 = vmul.f32 %v662, %v683
    %v685 = vadd.f32 %v299, %v684
    %v686 = vtanh.pop %v685
    %v687 = vsub.f32 %v582, %v686
    %v688 = vmul.f32 %v682, %v687
    %v689 = vadd.f32 %v686, %v688
    %690 = vmatpush.msra.mxu0 %v361
    %691 = vmatpush.msra.mxu0 %v358
    %692 = vmatpush.msra.mxu0 %v355
    %693 = vmatpush.msra.mxu0 %v352
    %694 = vmatpush.msra.mxu0 %v349
    %695 = vmatpush.msra.mxu0 %v346
    %696 = vmatpush.msra.mxu0 %v343
    %697 = vmatpush.msra.mxu0 %v340
    %698 = vmatpush.msra.mxu0 %v337
    %699 = vmatpush.msra.mxu0 %v334
    %700 = vmatpush.msra.mxu0 %v331
    %701 = vmatpush.msra.mxu0 %v328
    %702 = vmatpush.msra.mxu0 %v325
    %703 = vmatpush.msra.mxu0 %v322
    %704 = vmatpush.msra.mxu0 %v319
    %705 = vmatpush.msra.mxu0 %v316
    %706 = vmatmul.f32.gmra.mxu0 %v689
    %v707 = vpop.f32.mrf.mxu0
    %v708 = vadd.f32 0.0, %v707
    %709 = vdwg.mxu0
    %710 = vmatpush.msra.mxu0 %v362
    %711 = vmatpush.msra.mxu0 %v359
    %712 = vmatpush.msra.mxu0 %v356
    %713 = vmatpush.msra.mxu0 %v353
    %714 = vmatpush.msra.mxu0 %v350
    %715 = vmatpush.msra.mxu0 %v347
    %716 = vmatpush.msra.mxu0 %v344
    %717 = vmatpush.msra.mxu0 %v341
    %718 = vmatpush.msra.mxu0 %v338
    %719 = vmatpush.msra.mxu0 %v335
    %720 = vmatpush.msra.mxu0 %v332
    %721 = vmatpush.msra.mxu0 %v329
    %722 = vmatpush.msra.mxu0 %v326
    %723 = vmatpush.msra.mxu0 %v323
    %724 = vmatpush.msra.mxu0 %v320
    %725 = vmatpush.msra.mxu0 %v317
    %726 = vmatmul.f32.gmra.mxu0 %v689
    %v727 = vpop.f32.mrf.mxu0
    %v728 = vadd.f32 0.0, %v727
    %729 = vdwg.mxu0
    %730 = vmatpush.msra.mxu0 %v363
    %731 = vmatpush.msra.mxu0 %v360
    %732 = vmatpush.msra.mxu0 %v357
    %733 = vmatpush.msra.mxu0 %v354
    %734 = vmatpush.msra.mxu0 %v351
    %735 = vmatpush.msra.mxu0 %v348
    %736 = vmatpush.msra.mxu0 %v345
    %737 = vmatpush.msra.mxu0 %v342
    %738 = vmatpush.msra.mxu0 %v339
    %739 = vmatpush.msra.mxu0 %v336
    %740 = vmatpush.msra.mxu0 %v333
    %741 = vmatpush.msra.mxu0 %v330
    %742 = vmatpush.msra.mxu0 %v327
    %743 = vmatpush.msra.mxu0 %v324
    %744 = vmatpush.msra.mxu0 %v321
    %745 = vmatpush.msra.mxu0 %v318
    %746 = vmatmul.f32.gmra.mxu0 %v689
    %v747 = vpop.f32.mrf.mxu0
    %v748 = vadd.f32 0.0, %v747
    %749 = vdwg.mxu0
    %v750 = vadd.f32 %v220, %v708
    %v751 = vxor.u32 %v750, 2147483648
    %v752 = vmul.f32 %v751, 1.442695
    %v753 = vpow.pop %v752
    %v754 = vadd.f32 %v753, 1.0
    %v755 = vrcp.pop %v754
    %v756 = vmul.f32 %v754, %v755
    %v757 = vsub.f32 1.0, %v756
    %v758 = vmul.f32 %v755, %v757
    %v759 = vadd.f32 %v755, %v758
    %vm760 = vweird.f32 %v754
    %vm761 = vweird.f32 %v755
    %vm762 = vmor %vm760, %vm761
    %v763 = vsel %vm762, %v755, %v759
    %v764 = vand.u32 2147483647, %v754
    %vm765 = vcmp.eq.f32.partialorder %v764, 8.507059e+37
    %v766 = vand.u32 %v754, 2147483648
    %v767 = vor.u32 1.1754944e-38, %v766
    %v768 = vsel %vm765, %v767, %v763
    %v769 = vmul.f32 1.0, %v768
    %v770 = vadd.f32 %v261, %v728
    %v771 = vxor.u32 %v770, 2147483648
    %v772 = vmul.f32 %v771, 1.442695
    %v773 = vpow.pop %v772
    %v774 = vadd.f32 %v773, 1.0
    %v775 = vrcp.pop %v774
    %v776 = vmul.f32 %v774, %v775
    %v777 = vsub.f32 1.0, %v776
    %v778 = vmul.f32 %v775, %v777
    %v779 = vadd.f32 %v775, %v778
    %vm780 = vweird.f32 %v774
    %vm781 = vweird.f32 %v775
    %vm782 = vmor %vm780, %vm781
    %v783 = vsel %vm782, %v775, %v779
    %v784 = vand.u32 2147483647, %v774
    %vm785 = vcmp.eq.f32.partialorder %v784, 8.507059e+37
    %v786 = vand.u32 %v774, 2147483648
    %v787 = vor.u32 1.1754944e-38, %v786
    %v788 = vsel %vm785, %v787, %v783
    %v789 = vmul.f32 1.0, %v788
    %v790 = vadd.f32 %v748, %v366
    %v791 = vmul.f32 %v769, %v790
    %v792 = vadd.f32 %v302, %v791
    %v793 = vtanh.pop %v792
    %v794 = vsub.f32 %v689, %v793
    %v795 = vmul.f32 %v789, %v794
    %v796 = vadd.f32 %v793, %v795
    %797 = vmatpush.msra.mxu0 %v361
    %798 = vmatpush.msra.mxu0 %v358
    %799 = vmatpush.msra.mxu0 %v355
    %800 = vmatpush.msra.mxu0 %v352
    %801 = vmatpush.msra.mxu0 %v349
    %802 = vmatpush.msra.mxu0 %v346
    %803 = vmatpush.msra.mxu0 %v343
    %804 = vmatpush.msra.mxu0 %v340
    %805 = vmatpush.msra.mxu0 %v337
    %806 = vmatpush.msra.mxu0 %v334
    %807 = vmatpush.msra.mxu0 %v331
    %808 = vmatpush.msra.mxu0 %v328
    %809 = vmatpush.msra.mxu0 %v325
    %810 = vmatpush.msra.mxu0 %v322
    %811 = vmatpush.msra.mxu0 %v319
    %812 = vmatpush.msra.mxu0 %v316
    %813 = vmatmul.f32.gmra.mxu0 %v796
    %v814 = vpop.f32.mrf.mxu0
    %v815 = vadd.f32 0.0, %v814
    %816 = vdwg.mxu0
    %817 = vmatpush.msra.mxu0 %v362
    %818 = vmatpush.msra.mxu0 %v359
    %819 = vmatpush.msra.mxu0 %v356
    %820 = vmatpush.msra.mxu0 %v353
    %821 = vmatpush.msra.mxu0 %v350
    %822 = vmatpush.msra.mxu0 %v347
    %823 = vmatpush.msra.mxu0 %v344
    %824 = vmatpush.msra.mxu0 %v341
    %825 = vmatpush.msra.mxu0 %v338
    %826 = vmatpush.msra.mxu0 %v335
    %827 = vmatpush.msra.mxu0 %v332
    %828 = vmatpush.msra.mxu0 %v329
    %829 = vmatpush.msra.mxu0 %v326
    %830 = vmatpush.msra.mxu0 %v323
    %831 = vmatpush.msra.mxu0 %v320
    %832 = vmatpush.msra.mxu0 %v317
    %833 = vmatmul.f32.gmra.mxu0 %v796
    %v834 = vpop.f32.mrf.mxu0
    %v835 = vadd.f32 0.0, %v834
    %836 = vdwg.mxu0
    %837 = vmatpush.msra.mxu0 %v363
    %838 = vmatpush.msra.mxu0 %v360
    %839 = vmatpush.msra.mxu0 %v357
    %840 = vmatpush.msra.mxu0 %v354
    %841 = vmatpush.msra.mxu0 %v351
    %842 = vmatpush.msra.mxu0 %v348
    %843 = vmatpush.msra.mxu0 %v345
    %844 = vmatpush.msra.mxu0 %v342
    %845 = vmatpush.msra.mxu0 %v339
    %846 = vmatpush.msra.mxu0 %v336
    %847 = vmatpush.msra.mxu0 %v333
    %848 = vmatpush.msra.mxu0 %v330
    %849 = vmatpush.msra.mxu0 %v327
    %850 = vmatpush.msra.mxu0 %v324
    %851 = vmatpush.msra.mxu0 %v321
    %852 = vmatpush.msra.mxu0 %v318
    %853 = vmatmul.f32.gmra.mxu0 %v796
    %v854 = vpop.f32.mrf.mxu0
    %v855 = vadd.f32 0.0, %v854
    %856 = vdwg.mxu0
    %v857 = vadd.f32 %v223, %v815
    %v858 = vxor.u32 %v857, 2147483648
    %v859 = vmul.f32 %v858, 1.442695
    %v860 = vpow.pop %v859
    %v861 = vadd.f32 %v860, 1.0
    %v862 = vrcp.pop %v861
    %v863 = vmul.f32 %v861, %v862
    %v864 = vsub.f32 1.0, %v863
    %v865 = vmul.f32 %v862, %v864
    %v866 = vadd.f32 %v862, %v865
    %vm867 = vweird.f32 %v861
    %vm868 = vweird.f32 %v862
    %vm869 = vmor %vm867, %vm868
    %v870 = vsel %vm869, %v862, %v866
    %v871 = vand.u32 2147483647, %v861
    %vm872 = vcmp.eq.f32.partialorder %v871, 8.507059e+37
    %v873 = vand.u32 %v861, 2147483648
    %v874 = vor.u32 1.1754944e-38, %v873
    %v875 = vsel %vm872, %v874, %v870
    %v876 = vmul.f32 1.0, %v875
    %v877 = vadd.f32 %v264, %v835
    %v878 = vxor.u32 %v877, 2147483648
    %v879 = vmul.f32 %v878, 1.442695
    %v880 = vpow.pop %v879
    %v881 = vadd.f32 %v880, 1.0
    %v882 = vrcp.pop %v881
    %v883 = vmul.f32 %v881, %v882
    %v884 = vsub.f32 1.0, %v883
    %v885 = vmul.f32 %v882, %v884
    %v886 = vadd.f32 %v882, %v885
    %vm887 = vweird.f32 %v881
    %vm888 = vweird.f32 %v882
    %vm889 = vmor %vm887, %vm888
    %v890 = vsel %vm889, %v882, %v886
    %v891 = vand.u32 2147483647, %v881
    %vm892 = vcmp.eq.f32.partialorder %v891, 8.507059e+37
    %v893 = vand.u32 %v881, 2147483648
    %v894 = vor.u32 1.1754944e-38, %v893
    %v895 = vsel %vm892, %v894, %v890
    %v896 = vmul.f32 1.0, %v895
    %v897 = vadd.f32 %v855, %v366
    %v898 = vmul.f32 %v876, %v897
    %v899 = vadd.f32 %v305, %v898
    %v900 = vtanh.pop %v899
    %v901 = vsub.f32 %v796, %v900
    %v902 = vmul.f32 %v896, %v901
    %v903 = vadd.f32 %v900, %v902
    %904 = vmatpush.msra.mxu0 %v361
    %905 = vmatpush.msra.mxu0 %v358
    %906 = vmatpush.msra.mxu0 %v355
    %907 = vmatpush.msra.mxu0 %v352
    %908 = vmatpush.msra.mxu0 %v349
    %909 = vmatpush.msra.mxu0 %v346
    %910 = vmatpush.msra.mxu0 %v343
    %911 = vmatpush.msra.mxu0 %v340
    %912 = vmatpush.msra.mxu0 %v337
    %913 = vmatpush.msra.mxu0 %v334
    %914 = vmatpush.msra.mxu0 %v331
    %915 = vmatpush.msra.mxu0 %v328
    %916 = vmatpush.msra.mxu0 %v325
    %917 = vmatpush.msra.mxu0 %v322
    %918 = vmatpush.msra.mxu0 %v319
    %919 = vmatpush.msra.mxu0 %v316
    %920 = vmatmul.f32.gmra.mxu0 %v903
    %v921 = vpop.f32.mrf.mxu0
    %v922 = vadd.f32 0.0, %v921
    %923 = vdwg.mxu0
    %924 = vmatpush.msra.mxu0 %v362
    %925 = vmatpush.msra.mxu0 %v359
    %926 = vmatpush.msra.mxu0 %v356
    %927 = vmatpush.msra.mxu0 %v353
    %928 = vmatpush.msra.mxu0 %v350
    %929 = vmatpush.msra.mxu0 %v347
    %930 = vmatpush.msra.mxu0 %v344
    %931 = vmatpush.msra.mxu0 %v341
    %932 = vmatpush.msra.mxu0 %v338
    %933 = vmatpush.msra.mxu0 %v335
    %934 = vmatpush.msra.mxu0 %v332
    %935 = vmatpush.msra.mxu0 %v329
    %936 = vmatpush.msra.mxu0 %v326
    %937 = vmatpush.msra.mxu0 %v323
    %938 = vmatpush.msra.mxu0 %v320
    %939 = vmatpush.msra.mxu0 %v317
    %940 = vmatmul.f32.gmra.mxu0 %v903
    %v941 = vpop.f32.mrf.mxu0
    %v942 = vadd.f32 0.0, %v941
    %943 = vdwg.mxu0
    %944 = vmatpush.msra.mxu0 %v363
    %945 = vmatpush.msra.mxu0 %v360
    %946 = vmatpush.msra.mxu0 %v357
    %947 = vmatpush.msra.mxu0 %v354
    %948 = vmatpush.msra.mxu0 %v351
    %949 = vmatpush.msra.mxu0 %v348
    %950 = vmatpush.msra.mxu0 %v345
    %951 = vmatpush.msra.mxu0 %v342
    %952 = vmatpush.msra.mxu0 %v339
    %953 = vmatpush.msra.mxu0 %v336
    %954 = vmatpush.msra.mxu0 %v333
    %955 = vmatpush.msra.mxu0 %v330
    %956 = vmatpush.msra.mxu0 %v327
    %957 = vmatpush.msra.mxu0 %v324
    %958 = vmatpush.msra.mxu0 %v321
    %959 = vmatpush.msra.mxu0 %v318
    %960 = vmatmul.f32.gmra.mxu0 %v903
    %v961 = vpop.f32.mrf.mxu0
    %v962 = vadd.f32 0.0, %v961
    %963 = vdwg.mxu0
    %v964 = vadd.f32 %v226, %v922
    %v965 = vxor.u32 %v964, 2147483648
    %v966 = vmul.f32 %v965, 1.442695
    %v967 = vpow.pop %v966
    %v968 = vadd.f32 %v967, 1.0
    %v969 = vrcp.pop %v968
    %v970 = vmul.f32 %v968, %v969
    %v971 = vsub.f32 1.0, %v970
    %v972 = vmul.f32 %v969, %v971
    %v973 = vadd.f32 %v969, %v972
    %vm974 = vweird.f32 %v968
    %vm975 = vweird.f32 %v969
    %vm976 = vmor %vm974, %vm975
    %v977 = vsel %vm976, %v969, %v973
    %v978 = vand.u32 2147483647, %v968
    %vm979 = vcmp.eq.f32.partialorder %v978, 8.507059e+37
    %v980 = vand.u32 %v968, 2147483648
    %v981 = vor.u32 1.1754944e-38, %v980
    %v982 = vsel %vm979, %v981, %v977
    %v983 = vmul.f32 1.0, %v982
    %v984 = vadd.f32 %v267, %v942
    %v985 = vxor.u32 %v984, 2147483648
    %v986 = vmul.f32 %v985, 1.442695
    %v987 = vpow.pop %v986
    %v988 = vadd.f32 %v987, 1.0
    %v989 = vrcp.pop %v988
    %v990 = vmul.f32 %v988, %v989
    %v991 = vsub.f32 1.0, %v990
    %v992 = vmul.f32 %v989, %v991
    %v993 = vadd.f32 %v989, %v992
    %vm994 = vweird.f32 %v988
    %vm995 = vweird.f32 %v989
    %vm996 = vmor %vm994, %vm995
    %v997 = vsel %vm996, %v989, %v993
    %v998 = vand.u32 2147483647, %v988
    %vm999 = vcmp.eq.f32.partialorder %v998, 8.507059e+37
    %v1000 = vand.u32 %v988, 2147483648
    %v1001 = vor.u32 1.1754944e-38, %v1000
    %v1002 = vsel %vm999, %v1001, %v997
    %v1003 = vmul.f32 1.0, %v1002
    %v1004 = vadd.f32 %v962, %v366
    %v1005 = vmul.f32 %v983, %v1004
    %v1006 = vadd.f32 %v308, %v1005
    %v1007 = vtanh.pop %v1006
    %v1008 = vsub.f32 %v903, %v1007
    %v1009 = vmul.f32 %v1003, %v1008
    %v1010 = vadd.f32 %v1007, %v1009
    %1011 = vmatpush.msra.mxu0 %v361
    %1012 = vmatpush.msra.mxu0 %v358
    %1013 = vmatpush.msra.mxu0 %v355
    %1014 = vmatpush.msra.mxu0 %v352
    %1015 = vmatpush.msra.mxu0 %v349
    %1016 = vmatpush.msra.mxu0 %v346
    %1017 = vmatpush.msra.mxu0 %v343
    %1018 = vmatpush.msra.mxu0 %v340
    %1019 = vmatpush.msra.mxu0 %v337
    %1020 = vmatpush.msra.mxu0 %v334
    %1021 = vmatpush.msra.mxu0 %v331
    %1022 = vmatpush.msra.mxu0 %v328
    %1023 = vmatpush.msra.mxu0 %v325
    %1024 = vmatpush.msra.mxu0 %v322
    %1025 = vmatpush.msra.mxu0 %v319
    %1026 = vmatpush.msra.mxu0 %v316
    %1027 = vmatmul.f32.gmra.mxu0 %v1010
    %v1028 = vpop.f32.mrf.mxu0
    %v1029 = vadd.f32 0.0, %v1028
    %1030 = vdwg.mxu0
    %1031 = vmatpush.msra.mxu0 %v362
    %1032 = vmatpush.msra.mxu0 %v359
    %1033 = vmatpush.msra.mxu0 %v356
    %1034 = vmatpush.msra.mxu0 %v353
    %1035 = vmatpush.msra.mxu0 %v350
    %1036 = vmatpush.msra.mxu0 %v347
    %1037 = vmatpush.msra.mxu0 %v344
    %1038 = vmatpush.msra.mxu0 %v341
    %1039 = vmatpush.msra.mxu0 %v338
    %1040 = vmatpush.msra.mxu0 %v335
    %1041 = vmatpush.msra.mxu0 %v332
    %1042 = vmatpush.msra.mxu0 %v329
    %1043 = vmatpush.msra.mxu0 %v326
    %1044 = vmatpush.msra.mxu0 %v323
    %1045 = vmatpush.msra.mxu0 %v320
    %1046 = vmatpush.msra.mxu0 %v317
    %1047 = vmatmul.f32.gmra.mxu0 %v1010
    %v1048 = vpop.f32.mrf.mxu0
    %v1049 = vadd.f32 0.0, %v1048
    %1050 = vdwg.mxu0
    %1051 = vmatpush.msra.mxu0 %v363
    %1052 = vmatpush.msra.mxu0 %v360
    %1053 = vmatpush.msra.mxu0 %v357
    %1054 = vmatpush.msra.mxu0 %v354
    %1055 = vmatpush.msra.mxu0 %v351
    %1056 = vmatpush.msra.mxu0 %v348
    %1057 = vmatpush.msra.mxu0 %v345
    %1058 = vmatpush.msra.mxu0 %v342
    %1059 = vmatpush.msra.mxu0 %v339
    %1060 = vmatpush.msra.mxu0 %v336
    %1061 = vmatpush.msra.mxu0 %v333
    %1062 = vmatpush.msra.mxu0 %v330
    %1063 = vmatpush.msra.mxu0 %v327
    %1064 = vmatpush.msra.mxu0 %v324
    %1065 = vmatpush.msra.mxu0 %v321
    %1066 = vmatpush.msra.mxu0 %v318
    %1067 = vmatmul.f32.gmra.mxu0 %v1010
    %v1068 = vpop.f32.mrf.mxu0
    %v1069 = vadd.f32 0.0, %v1068
    %1070 = vdwg.mxu0
    %v1071 = vadd.f32 %v229, %v1029
    %v1072 = vxor.u32 %v1071, 2147483648
    %v1073 = vmul.f32 %v1072, 1.442695
    %v1074 = vpow.pop %v1073
    %v1075 = vadd.f32 %v1074, 1.0
    %v1076 = vrcp.pop %v1075
    %v1077 = vmul.f32 %v1075, %v1076
    %v1078 = vsub.f32 1.0, %v1077
    %v1079 = vmul.f32 %v1076, %v1078
    %v1080 = vadd.f32 %v1076, %v1079
    %vm1081 = vweird.f32 %v1075
    %vm1082 = vweird.f32 %v1076
    %vm1083 = vmor %vm1081, %vm1082
    %v1084 = vsel %vm1083, %v1076, %v1080
    %v1085 = vand.u32 2147483647, %v1075
    %vm1086 = vcmp.eq.f32.partialorder %v1085, 8.507059e+37
    %v1087 = vand.u32 %v1075, 2147483648
    %v1088 = vor.u32 1.1754944e-38, %v1087
    %v1089 = vsel %vm1086, %v1088, %v1084
    %v1090 = vmul.f32 1.0, %v1089
    %v1091 = vadd.f32 %v270, %v1049
    %v1092 = vxor.u32 %v1091, 2147483648
    %v1093 = vmul.f32 %v1092, 1.442695
    %v1094 = vpow.pop %v1093
    %v1095 = vadd.f32 %v1094, 1.0
    %v1096 = vrcp.pop %v1095
    %v1097 = vmul.f32 %v1095, %v1096
    %v1098 = vsub.f32 1.0, %v1097
    %v1099 = vmul.f32 %v1096, %v1098
    %v1100 = vadd.f32 %v1096, %v1099
    %vm1101 = vweird.f32 %v1095
    %vm1102 = vweird.f32 %v1096
    %vm1103 = vmor %vm1101, %vm1102
    %v1104 = vsel %vm1103, %v1096, %v1100
    %v1105 = vand.u32 2147483647, %v1095
    %vm1106 = vcmp.eq.f32.partialorder %v1105, 8.507059e+37
    %v1107 = vand.u32 %v1095, 2147483648
    %v1108 = vor.u32 1.1754944e-38, %v1107
    %v1109 = vsel %vm1106, %v1108, %v1104
    %v1110 = vmul.f32 1.0, %v1109
    %v1111 = vadd.f32 %v1069, %v366
    %v1112 = vmul.f32 %v1090, %v1111
    %v1113 = vadd.f32 %v311, %v1112
    %v1114 = vtanh.pop %v1113
    %v1115 = vsub.f32 %v1010, %v1114
    %v1116 = vmul.f32 %v1110, %v1115
    %v1117 = vadd.f32 %v1114, %v1116
    %1118 = vmatpush.msra.mxu0 %v361
    %1119 = vmatpush.msra.mxu0 %v358
    %1120 = vmatpush.msra.mxu0 %v355
    %1121 = vmatpush.msra.mxu0 %v352
    %1122 = vmatpush.msra.mxu0 %v349
    %1123 = vmatpush.msra.mxu0 %v346
    %1124 = vmatpush.msra.mxu0 %v343
    %1125 = vmatpush.msra.mxu0 %v340
    %1126 = vmatpush.msra.mxu0 %v337
    %1127 = vmatpush.msra.mxu0 %v334
    %1128 = vmatpush.msra.mxu0 %v331
    %1129 = vmatpush.msra.mxu0 %v328
    %1130 = vmatpush.msra.mxu0 %v325
    %1131 = vmatpush.msra.mxu0 %v322
    %1132 = vmatpush.msra.mxu0 %v319
    %1133 = vmatpush.msra.mxu0 %v316
    %1134 = vmatmul.f32.gmra.mxu0 %v1117
    %v1135 = vpop.f32.mrf.mxu0
    %v1136 = vadd.f32 0.0, %v1135
    %1137 = vdwg.mxu0
    %1138 = vmatpush.msra.mxu0 %v362
    %1139 = vmatpush.msra.mxu0 %v359
    %1140 = vmatpush.msra.mxu0 %v356
    %1141 = vmatpush.msra.mxu0 %v353
    %1142 = vmatpush.msra.mxu0 %v350
    %1143 = vmatpush.msra.mxu0 %v347
    %1144 = vmatpush.msra.mxu0 %v344
    %1145 = vmatpush.msra.mxu0 %v341
    %1146 = vmatpush.msra.mxu0 %v338
    %1147 = vmatpush.msra.mxu0 %v335
    %1148 = vmatpush.msra.mxu0 %v332
    %1149 = vmatpush.msra.mxu0 %v329
    %1150 = vmatpush.msra.mxu0 %v326
    %1151 = vmatpush.msra.mxu0 %v323
    %1152 = vmatpush.msra.mxu0 %v320
    %1153 = vmatpush.msra.mxu0 %v317
    %1154 = vmatmul.f32.gmra.mxu0 %v1117
    %v1155 = vpop.f32.mrf.mxu0
    %v1156 = vadd.f32 0.0, %v1155
    %1157 = vdwg.mxu0
    %1158 = vmatpush.msra.mxu0 %v363
    %1159 = vmatpush.msra.mxu0 %v360
    %1160 = vmatpush.msra.mxu0 %v357
    %1161 = vmatpush.msra.mxu0 %v354
    %1162 = vmatpush.msra.mxu0 %v351
    %1163 = vmatpush.msra.mxu0 %v348
    %1164 = vmatpush.msra.mxu0 %v345
    %1165 = vmatpush.msra.mxu0 %v342
    %1166 = vmatpush.msra.mxu0 %v339
    %1167 = vmatpush.msra.mxu0 %v336
    %1168 = vmatpush.msra.mxu0 %v333
    %1169 = vmatpush.msra.mxu0 %v330
    %1170 = vmatpush.msra.mxu0 %v327
    %1171 = vmatpush.msra.mxu0 %v324
    %1172 = vmatpush.msra.mxu0 %v321
    %1173 = vmatpush.msra.mxu0 %v318
    %1174 = vmatmul.f32.gmra.mxu0 %v1117
    %v1175 = vpop.f32.mrf.mxu0
    %v1176 = vadd.f32 0.0, %v1175
    %1177 = vdwg.mxu0
    %v1178 = vadd.f32 %v232, %v1136
    %v1179 = vxor.u32 %v1178, 2147483648
    %v1180 = vmul.f32 %v1179, 1.442695
    %v1181 = vpow.pop %v1180
    %v1182 = vadd.f32 %v1181, 1.0
    %v1183 = vrcp.pop %v1182
    %v1184 = vmul.f32 %v1182, %v1183
    %v1185 = vsub.f32 1.0, %v1184
    %v1186 = vmul.f32 %v1183, %v1185
    %v1187 = vadd.f32 %v1183, %v1186
    %vm1188 = vweird.f32 %v1182
    %vm1189 = vweird.f32 %v1183
    %vm1190 = vmor %vm1188, %vm1189
    %v1191 = vsel %vm1190, %v1183, %v1187
    %v1192 = vand.u32 2147483647, %v1182
    %vm1193 = vcmp.eq.f32.partialorder %v1192, 8.507059e+37
    %v1194 = vand.u32 %v1182, 2147483648
    %v1195 = vor.u32 1.1754944e-38, %v1194
    %v1196 = vsel %vm1193, %v1195, %v1191
    %v1197 = vmul.f32 1.0, %v1196
    %v1198 = vadd.f32 %v273, %v1156
    %v1199 = vxor.u32 %v1198, 2147483648
    %v1200 = vmul.f32 %v1199, 1.442695
    %v1201 = vpow.pop %v1200
    %v1202 = vadd.f32 %v1201, 1.0
    %v1203 = vrcp.pop %v1202
    %v1204 = vmul.f32 %v1202, %v1203
    %v1205 = vsub.f32 1.0, %v1204
    %v1206 = vmul.f32 %v1203, %v1205
    %v1207 = vadd.f32 %v1203, %v1206
    %vm1208 = vweird.f32 %v1202
    %vm1209 = vweird.f32 %v1203
    %vm1210 = vmor %vm1208, %vm1209
    %v1211 = vsel %vm1210, %v1203, %v1207
    %v1212 = vand.u32 2147483647, %v1202
    %vm1213 = vcmp.eq.f32.partialorder %v1212, 8.507059e+37
    %v1214 = vand.u32 %v1202, 2147483648
    %v1215 = vor.u32 1.1754944e-38, %v1214
    %v1216 = vsel %vm1213, %v1215, %v1211
    %v1217 = vmul.f32 1.0, %v1216
    %v1218 = vadd.f32 %v1176, %v366
    %v1219 = vmul.f32 %v1197, %v1218
    %v1220 = vadd.f32 %v314, %v1219
    %v1221 = vtanh.pop %v1220
    %v1222 = vsub.f32 %v1117, %v1221
    %v1223 = vmul.f32 %v1217, %v1222
    %v1224 = vadd.f32 %v1221, %v1223
    %1225 = vst [vmem:[#allocation2] sm:$0xff] %v1224
    // Predicated region
    $region62: #{tpu_custom_call.1} parent=1 // pred_check
      %p1226 = pneg %p123
    $region63: #{tpu_custom_call.1} parent=1 // pred_check_branch
      %1228 = sbr.rel (%p1226) target = $region65
    $region64: #{tpu_custom_call.1} parent=1 // pred_region
      %1229 = vst [vmem:[#allocation15] sm:$0xff] %v1224
      %v1230 = vld [vmem:[#allocation12] sm:$0xff]
      %v1231 = vld [vmem:[#allocation12 + $0x8] sm:$0xff]
      %v1232 = vld [vmem:[#allocation12 + $0x10] sm:$0xff]
      %v1233 = vld [vmem:[#allocation12 + $0x18] sm:$0xff]
      %v1234 = vld [vmem:[#allocation12 + $0x20] sm:$0xff]
      %v1235 = vld [vmem:[#allocation12 + $0x28] sm:$0xff]
      %v1236 = vld [vmem:[#allocation12 + $0x30] sm:$0xff]
      %v1237 = vld [vmem:[#allocation12 + $0x38] sm:$0xff]
      %v1238 = vld [vmem:[#allocation12 + $0x40] sm:$0xff]
      %v1239 = vld [vmem:[#allocation12 + $0x48] sm:$0xff]
      %v1240 = vld [vmem:[#allocation12 + $0x50] sm:$0xff]
      %v1241 = vld [vmem:[#allocation12 + $0x58] sm:$0xff]
      %v1242 = vld [vmem:[#allocation12 + $0x60] sm:$0xff]
      %v1243 = vld [vmem:[#allocation12 + $0x68] sm:$0xff]
      %v1244 = vld [vmem:[#allocation12 + $0x70] sm:$0xff]
      %v1245 = vld [vmem:[#allocation12 + $0x78] sm:$0xff]
      %v1246 = vld [vmem:[%s7] sm:$0x1]
      %v1248 = vperm.slane %v1246, 0
      %1250 = vmatpush.msra.mxu0 %v1245
      %1251 = vmatpush.msra.mxu0 %v1244
      %1252 = vmatpush.msra.mxu0 %v1243
      %1253 = vmatpush.msra.mxu0 %v1242
      %1254 = vmatpush.msra.mxu0 %v1241
      %1255 = vmatpush.msra.mxu0 %v1240
      %1256 = vmatpush.msra.mxu0 %v1239
      %1257 = vmatpush.msra.mxu0 %v1238
      %1258 = vmatpush.msra.mxu0 %v1237
      %1259 = vmatpush.msra.mxu0 %v1236
      %1260 = vmatpush.msra.mxu0 %v1235
      %1261 = vmatpush.msra.mxu0 %v1234
      %1262 = vmatpush.msra.mxu0 %v1233
      %1263 = vmatpush.msra.mxu0 %v1232
      %1264 = vmatpush.msra.mxu0 %v1231
      %1265 = vmatpush.msra.mxu0 %v1230
      %1266 = vmatmul.f32.gmra.mxu0 %v1224
      %v1267 = vpop.f32.mrf.mxu0
      %v1268 = vadd.f32 %v1248, %v1267
      %1269 = vdwg.mxu0
      %1270 = vst [vmem:[#allocation14] sm:$0xff] %v1268
    $region65: #{tpu_custom_call.1} parent=1 // pred_fallthru
      _
    // Predicated region
    $region66: #{tpu_custom_call.1} parent=1 // pred_check
      _
    $region67: #{tpu_custom_call.1} parent=1 // pred_check_branch
      %1272 = sbr.rel (0) target = $region69
    $region68: #{tpu_custom_call.1} parent=1 // pred_region
      %1274 = vsyncadd [#allocation5], 0
      %s1276 = sshll.u32 [#allocation14], 4
      %s1277 = int_to_ptr.vmem [resolvable:$true] %s1276
      %s1278 = sshll.u32 %s8, 4
      %s1279 = int_to_ptr.hbm [resolvable:$true] %s1278
      %1281 = dma.vmem_to_hbm [thread:$0]  %s1277, 128, %s1279, [#allocation5]
    $region69: #{tpu_custom_call.1} parent=1 // pred_fallthru
      _
    // Predicated region
    $region70: #{tpu_custom_call.1} parent=1 // pred_check
      _
    $region71: #{tpu_custom_call.1} parent=1 // pred_check_branch
      %1283 = sbr.rel (0) target = $region73
    $region72: #{tpu_custom_call.1} parent=1 // pred_region
      %1285 = vsyncadd [#allocation16], 0
      %s1287 = sshll.u32 [#allocation15], 4
      %s1288 = int_to_ptr.vmem [resolvable:$true] %s1287
      %s1289 = sshll.u32 %s9, 4
      %s1290 = int_to_ptr.hbm [resolvable:$true] %s1289
      %1292 = dma.vmem_to_hbm [thread:$0]  %s1288, 128, %s1290, [#allocation16]
    $region73: #{tpu_custom_call.1} parent=1 // pred_fallthru
      _
    // Predicated region
    $region74: #{tpu_custom_call.1} parent=1 // pred_check
      _
    $region75: #{tpu_custom_call.1} parent=1 // pred_check_branch
      %1294 = sbr.rel (0) target = $region77
    $region76: #{tpu_custom_call.1} parent=1 // pred_region
      %1296 = dma.done [#allocation5], 128
    $region77: #{tpu_custom_call.1} parent=1 // pred_fallthru
      _
    // Predicated region
    $region78: #{tpu_custom_call.1} parent=1 // pred_check
      _
    $region79: #{tpu_custom_call.1} parent=1 // pred_check_branch
      %1298 = sbr.rel (0) target = $region81
    $region80: #{tpu_custom_call.1} parent=1 // pred_region
      %1300 = dma.done [#allocation16], 128
    $region81: #{tpu_custom_call.1} parent=1 // pred_fallthru
      _
    %1301 = vsyncpa [#allocation4], 1
    %1302 = vsyncpa [#allocation7], 1
    %1303 = vsyncpa [#allocation10], 1
    %1304 = vsyncpa [#allocation13], 1
    %1305 = vsyncpa [#allocation5], 1
    %1306 = vsyncpa [#allocation16], 1

</llo_original>
